<compile_context>
chip_gen: v6e
topology: v6e:2x2x1
jax: 0.10.0
libtpu: 0.0.40
codegen_flags: <defaults>
</compile_context>

<pallas_src>
import functools
import math

import jax
import jax.numpy as jnp
from jax import lax
from jax.experimental import pallas as pl
from jax.experimental.pallas import tpu as pltpu


def mha_kernel(x_ref, wqkv_ref, bqkv_ref, wo_ref, bo_ref, o_ref, *, num_heads, d_k):
    # Per grid step (one batch element):
    #   x_ref    : (1, S, D)
    #   wqkv_ref : (3D, D)   rows = [Wq; Wk; Wv], torch (out_features, in_features) layout
    #   bqkv_ref : (1, 3D)
    #   wo_ref   : (D, D)    torch (out_features, in_features) layout
    #   bo_ref   : (1, D)
    #   o_ref    : (1, S, D)
    d_model = num_heads * d_k
    x = x_ref[0]  # (S, D)

    # Fused QKV projection: single MXU matmul, contracting the 'in' dims of both
    # operands (no transposes materialized).
    qkv = lax.dot_general(
        x, wqkv_ref[...],
        dimension_numbers=(((1,), (1,)), ((), ())),
        preferred_element_type=jnp.float32,
    )                                                    # (S, 3D)
    qkv = qkv + bqkv_ref[...]                            # (1, 3D) broadcasts over S

    inv_sqrt_dk = 1.0 / math.sqrt(d_k)

    head_outs = []
    for h in range(num_heads):                           # static unroll (num_heads small)
        lo = h * d_k
        qh = qkv[:, lo:lo + d_k]                         # (S, d_k)
        kh = qkv[:, d_model + lo:d_model + lo + d_k]     # (S, d_k)
        vh = qkv[:, 2 * d_model + lo:2 * d_model + lo + d_k]

        # scores = Q_h @ K_h^T / sqrt(d_k)  (contract d_k; no explicit transpose)
        scores = lax.dot_general(
            qh, kh,
            dimension_numbers=(((1,), (1,)), ((), ())),
            preferred_element_type=jnp.float32,
        ) * inv_sqrt_dk                                  # (S, S)

        # numerically-stable softmax over the key axis
        m = jnp.max(scores, axis=-1, keepdims=True)
        p = jnp.exp(scores - m)
        p = p / jnp.sum(p, axis=-1, keepdims=True)

        head_outs.append(
            jnp.dot(p, vh, preferred_element_type=jnp.float32)   # (S, d_k)
        )

    attn = jnp.concatenate(head_outs, axis=-1)           # (S, D)

    out = lax.dot_general(
        attn, wo_ref[...],
        dimension_numbers=(((1,), (1,)), ((), ())),
        preferred_element_type=jnp.float32,
    ) + bo_ref[...]                                      # (S, D)

    o_ref[0] = out.astype(o_ref.dtype)


def multi_head_attention(x, wq, bq, wk, bk, wv, bv, wo, bo, *, num_heads):
    """x: (B, S, D) f32; weights in torch nn.Linear (out_features, in_features) layout."""
    B, S, D = x.shape
    assert D % num_heads == 0
    d_k = D // num_heads

    # Pack QKV params once (tiny arrays); layout stays torch (out, in).
    wqkv = jnp.concatenate([wq, wk, wv], axis=0)          # (3D, D)
    bqkv = jnp.concatenate([bq, bk, bv], axis=0)[None, :] # (1, 3D)
    bo2 = bo[None, :]                                     # (1, D)

    kernel = functools.partial(mha_kernel, num_heads=num_heads, d_k=d_k)

    return pl.pallas_call(
        kernel,
        out_shape=jax.ShapeDtypeStruct((B, S, D), x.dtype),
        grid=(B,),
        in_specs=[
            pl.BlockSpec((1, S, D), lambda b: (b, 0, 0)),      # x: one batch per step
            pl.BlockSpec((3 * D, D), lambda b: (0, 0)),        # packed QKV weight (resident)
            pl.BlockSpec((1, 3 * D), lambda b: (0, 0)),        # packed QKV bias
            pl.BlockSpec((D, D), lambda b: (0, 0)),            # output-proj weight
            pl.BlockSpec((1, D), lambda b: (0, 0)),            # output-proj bias
        ],
        out_specs=pl.BlockSpec((1, S, D), lambda b: (b, 0, 0)),
        compiler_params=pltpu.CompilerParams(
            dimension_semantics=("parallel",),                 # shard batch across TCs (v7x)
        ),
    )(x, wqkv, bqkv, wo, bo2)


def mha_ref(x, wq, bq, wk, bk, wv, bv, wo, bo, *, num_heads):
    """Pure-JAX reference mirroring the PyTorch forward."""
    B, S, D = x.shape
    d_k = D // num_heads
    hp = jax.lax.Precision.HIGHEST

    q = jnp.dot(x, wq.T, precision=hp) + bq
    k = jnp.dot(x, wk.T, precision=hp) + bk
    v = jnp.dot(x, wv.T, precision=hp) + bv

    q = q.reshape(B, S, num_heads, d_k).transpose(0, 2, 1, 3)
    k = k.reshape(B, S, num_heads, d_k).transpose(0, 2, 1, 3)
    v = v.reshape(B, S, num_heads, d_k).transpose(0, 2, 1, 3)

    scores = jnp.einsum("bhqd,bhkd->bhqk", q, k, precision=hp) / math.sqrt(d_k)
    w = jax.nn.softmax(scores, axis=-1)
    o = jnp.einsum("bhqk,bhkd->bhqd", w, v, precision=hp)
    o = o.transpose(0, 2, 1, 3).reshape(B, S, D)
    return jnp.dot(o, wo.T, precision=hp) + bo


if __name__ == "__main__":
    B, S, d_model, num_heads = 2, 16, 128, 4   # lane-dense: d_model = 128 on the lane axis

    key = jax.random.PRNGKey(0)
    kx, kq, kk, kv, ko, kbq, kbk, kbv, kbo = jax.random.split(key, 9)

    x = jax.random.normal(kx, (B, S, d_model), dtype=jnp.float32)

    # torch.nn.Linear default init: uniform +/- 1/sqrt(fan_in)
    bound = 1.0 / math.sqrt(d_model)

    def u(k, shape):
        return jax.random.uniform(k, shape, minval=-bound, maxval=bound, dtype=jnp.float32)

    wq, wk_, wv, wo = (u(kq, (d_model, d_model)), u(kk, (d_model, d_model)),
                       u(kv, (d_model, d_model)), u(ko, (d_model, d_model)))
    bq, bk_, bv, bo = (u(kbq, (d_model,)), u(kbk, (d_model,)),
                       u(kbv, (d_model,)), u(kbo, (d_model,)))

    out = multi_head_attention(x, wq, bq, wk_, bk_, wv, bv, wo, bo, num_heads=num_heads)
    out = jax.block_until_ready(out)

    ref = mha_ref(x, wq, bq, wk_, bk_, wv, bv, wo, bo, num_heads=num_heads)

    assert out.shape == (B, S, d_model)
    assert jnp.allclose(out, ref, atol=2e-3, rtol=2e-3), "mismatch vs reference"

    print("KERNEL_OK")
</pallas_src>

<mosaic_0001>
module attributes {stable_mosaic.version = 11 : i64} {
  func.func @mha_kernel(%arg0: i32, %arg1: memref<1x16x128xf32, #tpu.memory_space<vmem>>, %arg2: memref<384x128xf32, #tpu.memory_space<vmem>>, %arg3: memref<1x384xf32, #tpu.memory_space<vmem>>, %arg4: memref<128x128xf32, #tpu.memory_space<vmem>>, %arg5: memref<1x128xf32, #tpu.memory_space<vmem>>, %arg6: memref<1x16x128xf32, #tpu.memory_space<vmem>>) attributes {dimension_semantics = [#tpu.dimension_semantics<parallel>], iteration_bounds = array<i64: 2>, scalar_prefetch = 0 : i64, scratch_operands = 0 : i64, tpu.core_type = #tpu.core_type<tc>, window_params = [{transform_indices = @transform_0, window_bounds = array<i64: 1, 16, 128>}, {pipeline_mode = #tpu.pipeline_mode<synchronous>, transform_indices = @transform_1, window_bounds = array<i64: 384, 128>}, {pipeline_mode = #tpu.pipeline_mode<synchronous>, transform_indices = @transform_2, window_bounds = array<i64: 1, 384>}, {pipeline_mode = #tpu.pipeline_mode<synchronous>, transform_indices = @transform_3, window_bounds = array<i64: 128, 128>}, {pipeline_mode = #tpu.pipeline_mode<synchronous>, transform_indices = @transform_4, window_bounds = array<i64: 1, 128>}, {transform_indices = @transform_5, window_bounds = array<i64: 1, 16, 128>}]} {
    %c0 = arith.constant 0 : index
    %c0_0 = arith.constant 0 : index
    %c0_1 = arith.constant 0 : index
    %0 = vector.load %arg1[%c0, %c0_0, %c0_1] : memref<1x16x128xf32, #tpu.memory_space<vmem>>, vector<1x16x128xf32>
    %1 = vector.shape_cast %0 : vector<1x16x128xf32> to vector<16x128xf32>
    %c0_2 = arith.constant 0 : index
    %c0_3 = arith.constant 0 : index
    %2 = vector.load %arg2[%c0_2, %c0_3] : memref<384x128xf32, #tpu.memory_space<vmem>>, vector<384x128xf32>
    %cst = arith.constant dense<0.000000e+00> : vector<16x384xf32>
    %3 = tpu.matmul %1, %2, %cst {dimension_numbers = #tpu.dot_dimension_numbers<[1], [1], [0], [0], [0, 0, 1, 0], [], []>} : vector<16x128xf32>, vector<384x128xf32>, vector<16x384xf32> -> vector<16x384xf32>
    %c0_4 = arith.constant 0 : index
    %c0_5 = arith.constant 0 : index
    %4 = vector.load %arg3[%c0_4, %c0_5] : memref<1x384xf32, #tpu.memory_space<vmem>>, vector<1x384xf32>
    %5 = vector.broadcast %4 : vector<1x384xf32> to vector<16x384xf32>
    %6 = arith.addf %3, %5 : vector<16x384xf32>
    %7 = vector.extract_strided_slice %6 {offsets = [0, 0], sizes = [16, 32], strides = [1, 1]} : vector<16x384xf32> to vector<16x32xf32>
    %8 = vector.extract_strided_slice %6 {offsets = [0, 128], sizes = [16, 32], strides = [1, 1]} : vector<16x384xf32> to vector<16x32xf32>
    %9 = vector.extract_strided_slice %6 {offsets = [0, 256], sizes = [16, 32], strides = [1, 1]} : vector<16x384xf32> to vector<16x32xf32>
    %cst_6 = arith.constant dense<0.000000e+00> : vector<16x16xf32>
    %10 = tpu.matmul %7, %8, %cst_6 {dimension_numbers = #tpu.dot_dimension_numbers<[1], [1], [0], [0], [0, 0, 1, 0], [], []>} : vector<16x32xf32>, vector<16x32xf32>, vector<16x16xf32> -> vector<16x16xf32>
    %cst_7 = arith.constant 0.176776692 : f32
    %11 = vector.broadcast %cst_7 : f32 to vector<16x16xf32>
    %12 = arith.mulf %10, %11 : vector<16x16xf32>
    %cst_8 = arith.constant dense<0xFF800000> : vector<16xf32>
    %13 = vector.multi_reduction <maximumf>, %12, %cst_8 [1] : vector<16x16xf32> to vector<16xf32>
    %14 = vector.shape_cast %13 : vector<16xf32> to vector<16x1xf32>
    %15 = vector.broadcast %14 : vector<16x1xf32> to vector<16x16xf32>
    %16 = arith.subf %12, %15 : vector<16x16xf32>
    %17 = math.exp %16 : vector<16x16xf32>
    %cst_9 = arith.constant dense<0.000000e+00> : vector<16xf32>
    %18 = vector.multi_reduction <add>, %17, %cst_9 [1] : vector<16x16xf32> to vector<16xf32>
    %19 = vector.shape_cast %18 : vector<16xf32> to vector<16x1xf32>
    %20 = vector.broadcast %19 : vector<16x1xf32> to vector<16x16xf32>
    %21 = arith.divf %17, %20 : vector<16x16xf32>
    %cst_10 = arith.constant dense<0.000000e+00> : vector<16x32xf32>
    %22 = tpu.matmul %21, %9, %cst_10 {dimension_numbers = #tpu.dot_dimension_numbers<[1], [0], [0], [1], [0, 0, 1, 1], [], []>} : vector<16x16xf32>, vector<16x32xf32>, vector<16x32xf32> -> vector<16x32xf32>
    %23 = vector.extract_strided_slice %6 {offsets = [0, 32], sizes = [16, 32], strides = [1, 1]} : vector<16x384xf32> to vector<16x32xf32>
    %24 = vector.extract_strided_slice %6 {offsets = [0, 160], sizes = [16, 32], strides = [1, 1]} : vector<16x384xf32> to vector<16x32xf32>
    %25 = vector.extract_strided_slice %6 {offsets = [0, 288], sizes = [16, 32], strides = [1, 1]} : vector<16x384xf32> to vector<16x32xf32>
    %cst_11 = arith.constant dense<0.000000e+00> : vector<16x16xf32>
    %26 = tpu.matmul %23, %24, %cst_11 {dimension_numbers = #tpu.dot_dimension_numbers<[1], [1], [0], [0], [0, 0, 1, 0], [], []>} : vector<16x32xf32>, vector<16x32xf32>, vector<16x16xf32> -> vector<16x16xf32>
    %cst_12 = arith.constant 0.176776692 : f32
    %27 = vector.broadcast %cst_12 : f32 to vector<16x16xf32>
    %28 = arith.mulf %26, %27 : vector<16x16xf32>
    %cst_13 = arith.constant dense<0xFF800000> : vector<16xf32>
    %29 = vector.multi_reduction <maximumf>, %28, %cst_13 [1] : vector<16x16xf32> to vector<16xf32>
    %30 = vector.shape_cast %29 : vector<16xf32> to vector<16x1xf32>
    %31 = vector.broadcast %30 : vector<16x1xf32> to vector<16x16xf32>
    %32 = arith.subf %28, %31 : vector<16x16xf32>
    %33 = math.exp %32 : vector<16x16xf32>
    %cst_14 = arith.constant dense<0.000000e+00> : vector<16xf32>
    %34 = vector.multi_reduction <add>, %33, %cst_14 [1] : vector<16x16xf32> to vector<16xf32>
    %35 = vector.shape_cast %34 : vector<16xf32> to vector<16x1xf32>
    %36 = vector.broadcast %35 : vector<16x1xf32> to vector<16x16xf32>
    %37 = arith.divf %33, %36 : vector<16x16xf32>
    %cst_15 = arith.constant dense<0.000000e+00> : vector<16x32xf32>
    %38 = tpu.matmul %37, %25, %cst_15 {dimension_numbers = #tpu.dot_dimension_numbers<[1], [0], [0], [1], [0, 0, 1, 1], [], []>} : vector<16x16xf32>, vector<16x32xf32>, vector<16x32xf32> -> vector<16x32xf32>
    %39 = vector.extract_strided_slice %6 {offsets = [0, 64], sizes = [16, 32], strides = [1, 1]} : vector<16x384xf32> to vector<16x32xf32>
    %40 = vector.extract_strided_slice %6 {offsets = [0, 192], sizes = [16, 32], strides = [1, 1]} : vector<16x384xf32> to vector<16x32xf32>
    %41 = vector.extract_strided_slice %6 {offsets = [0, 320], sizes = [16, 32], strides = [1, 1]} : vector<16x384xf32> to vector<16x32xf32>
    %cst_16 = arith.constant dense<0.000000e+00> : vector<16x16xf32>
    %42 = tpu.matmul %39, %40, %cst_16 {dimension_numbers = #tpu.dot_dimension_numbers<[1], [1], [0], [0], [0, 0, 1, 0], [], []>} : vector<16x32xf32>, vector<16x32xf32>, vector<16x16xf32> -> vector<16x16xf32>
    %cst_17 = arith.constant 0.176776692 : f32
    %43 = vector.broadcast %cst_17 : f32 to vector<16x16xf32>
    %44 = arith.mulf %42, %43 : vector<16x16xf32>
    %cst_18 = arith.constant dense<0xFF800000> : vector<16xf32>
    %45 = vector.multi_reduction <maximumf>, %44, %cst_18 [1] : vector<16x16xf32> to vector<16xf32>
    %46 = vector.shape_cast %45 : vector<16xf32> to vector<16x1xf32>
    %47 = vector.broadcast %46 : vector<16x1xf32> to vector<16x16xf32>
    %48 = arith.subf %44, %47 : vector<16x16xf32>
    %49 = math.exp %48 : vector<16x16xf32>
    %cst_19 = arith.constant dense<0.000000e+00> : vector<16xf32>
    %50 = vector.multi_reduction <add>, %49, %cst_19 [1] : vector<16x16xf32> to vector<16xf32>
    %51 = vector.shape_cast %50 : vector<16xf32> to vector<16x1xf32>
    %52 = vector.broadcast %51 : vector<16x1xf32> to vector<16x16xf32>
    %53 = arith.divf %49, %52 : vector<16x16xf32>
    %cst_20 = arith.constant dense<0.000000e+00> : vector<16x32xf32>
    %54 = tpu.matmul %53, %41, %cst_20 {dimension_numbers = #tpu.dot_dimension_numbers<[1], [0], [0], [1], [0, 0, 1, 1], [], []>} : vector<16x16xf32>, vector<16x32xf32>, vector<16x32xf32> -> vector<16x32xf32>
    %55 = vector.extract_strided_slice %6 {offsets = [0, 96], sizes = [16, 32], strides = [1, 1]} : vector<16x384xf32> to vector<16x32xf32>
    %56 = vector.extract_strided_slice %6 {offsets = [0, 224], sizes = [16, 32], strides = [1, 1]} : vector<16x384xf32> to vector<16x32xf32>
    %57 = vector.extract_strided_slice %6 {offsets = [0, 352], sizes = [16, 32], strides = [1, 1]} : vector<16x384xf32> to vector<16x32xf32>
    %cst_21 = arith.constant dense<0.000000e+00> : vector<16x16xf32>
    %58 = tpu.matmul %55, %56, %cst_21 {dimension_numbers = #tpu.dot_dimension_numbers<[1], [1], [0], [0], [0, 0, 1, 0], [], []>} : vector<16x32xf32>, vector<16x32xf32>, vector<16x16xf32> -> vector<16x16xf32>
    %cst_22 = arith.constant 0.176776692 : f32
    %59 = vector.broadcast %cst_22 : f32 to vector<16x16xf32>
    %60 = arith.mulf %58, %59 : vector<16x16xf32>
    %cst_23 = arith.constant dense<0xFF800000> : vector<16xf32>
    %61 = vector.multi_reduction <maximumf>, %60, %cst_23 [1] : vector<16x16xf32> to vector<16xf32>
    %62 = vector.shape_cast %61 : vector<16xf32> to vector<16x1xf32>
    %63 = vector.broadcast %62 : vector<16x1xf32> to vector<16x16xf32>
    %64 = arith.subf %60, %63 : vector<16x16xf32>
    %65 = math.exp %64 : vector<16x16xf32>
    %cst_24 = arith.constant dense<0.000000e+00> : vector<16xf32>
    %66 = vector.multi_reduction <add>, %65, %cst_24 [1] : vector<16x16xf32> to vector<16xf32>
    %67 = vector.shape_cast %66 : vector<16xf32> to vector<16x1xf32>
    %68 = vector.broadcast %67 : vector<16x1xf32> to vector<16x16xf32>
    %69 = arith.divf %65, %68 : vector<16x16xf32>
    %cst_25 = arith.constant dense<0.000000e+00> : vector<16x32xf32>
    %70 = tpu.matmul %69, %57, %cst_25 {dimension_numbers = #tpu.dot_dimension_numbers<[1], [0], [0], [1], [0, 0, 1, 1], [], []>} : vector<16x16xf32>, vector<16x32xf32>, vector<16x32xf32> -> vector<16x32xf32>
    %71 = tpu.concatenate %22, %38, %54, %70 in 1 : vector<16x32xf32>, vector<16x32xf32>, vector<16x32xf32>, vector<16x32xf32> -> vector<16x128xf32>
    %c0_26 = arith.constant 0 : index
    %c0_27 = arith.constant 0 : index
    %72 = vector.load %arg4[%c0_26, %c0_27] : memref<128x128xf32, #tpu.memory_space<vmem>>, vector<128x128xf32>
    %cst_28 = arith.constant dense<0.000000e+00> : vector<16x128xf32>
    %73 = tpu.matmul %71, %72, %cst_28 {dimension_numbers = #tpu.dot_dimension_numbers<[1], [1], [0], [0], [0, 0, 1, 0], [], []>} : vector<16x128xf32>, vector<128x128xf32>, vector<16x128xf32> -> vector<16x128xf32>
    %c0_29 = arith.constant 0 : index
    %c0_30 = arith.constant 0 : index
    %74 = vector.load %arg5[%c0_29, %c0_30] : memref<1x128xf32, #tpu.memory_space<vmem>>, vector<1x128xf32>
    %75 = vector.broadcast %74 : vector<1x128xf32> to vector<16x128xf32>
    %76 = arith.addf %73, %75 : vector<16x128xf32>
    %c0_31 = arith.constant 0 : index
    %c0_32 = arith.constant 0 : index
    %c0_33 = arith.constant 0 : index
    %77 = vector.load %arg6[%c0_31, %c0_32, %c0_33] : memref<1x16x128xf32, #tpu.memory_space<vmem>>, vector<1x16x128xf32>
    %78 = vector.shape_cast %77 : vector<1x16x128xf32> to vector<16x128xf32>
    %79 = vector.shape_cast %76 : vector<16x128xf32> to vector<1x16x128xf32>
    tpu.vector_store %arg6[%c0_31, %c0_32, %c0_33], %79 {strides = array<i32>} : memref<1x16x128xf32, #tpu.memory_space<vmem>>, vector<1x16x128xf32>,
    return
  }
  func.func @transform_0(%arg0: i32) -> (i32, i32, i32) {
    %c0_i32 = arith.constant 0 : i32
    %c0_i32_0 = arith.constant 0 : i32
    %c0_i32_1 = arith.constant 0 : i32
    return %arg0, %c0_i32, %c0_i32_0 : i32, i32, i32
  }
  func.func @transform_1(%arg0: i32) -> (i32, i32) {
    %c0_i32 = arith.constant 0 : i32
    %c0_i32_0 = arith.constant 0 : i32
    %c0_i32_1 = arith.constant 0 : i32
    return %c0_i32, %c0_i32_0 : i32, i32
  }
  func.func @transform_2(%arg0: i32) -> (i32, i32) {
    %c0_i32 = arith.constant 0 : i32
    %c0_i32_0 = arith.constant 0 : i32
    %c0_i32_1 = arith.constant 0 : i32
    return %c0_i32, %c0_i32_0 : i32, i32
  }
  func.func @transform_3(%arg0: i32) -> (i32, i32) {
    %c0_i32 = arith.constant 0 : i32
    %c0_i32_0 = arith.constant 0 : i32
    %c0_i32_1 = arith.constant 0 : i32
    return %c0_i32, %c0_i32_0 : i32, i32
  }
  func.func @transform_4(%arg0: i32) -> (i32, i32) {
    %c0_i32 = arith.constant 0 : i32
    %c0_i32_0 = arith.constant 0 : i32
    %c0_i32_1 = arith.constant 0 : i32
    return %c0_i32, %c0_i32_0 : i32, i32
  }
  func.func @transform_5(%arg0: i32) -> (i32, i32, i32) {
    %c0_i32 = arith.constant 0 : i32
    %c0_i32_0 = arith.constant 0 : i32
    %c0_i32_1 = arith.constant 0 : i32
    return %arg0, %c0_i32, %c0_i32_0 : i32, i32, i32
  }
}

</mosaic_0001>

<llo_original>
// kernel: tpu_custom_call.1
$region0: #{tpu_custom_call.1}
  #allocation0 [shape = 'u32[]', space=smem, size = 0x4, offset = 0x4, fixed_abs, tag = 'smem constant byte address 0x4 - core index']
  #allocation1 [shape = 'u32[144,128]{1,0:T(1,128)}', space=vmem, size = 0x12000, scoped, tag = 'internal scratch']
  %s0 = inlined_call_operand.hbm [shape: f32[2,16,128], index: 0, kind: input, shape index: {}]
  %s1 = inlined_call_operand.hbm [shape: f32[384,128], index: 1, kind: input, shape index: {}]
  %s2 = inlined_call_operand.vmem [shape: f32[1,384], index: 2, kind: input, shape index: {}]
  %s3 = inlined_call_operand.hbm [shape: f32[128,128], index: 3, kind: input, shape index: {}]
  %s4 = inlined_call_operand.vmem [shape: f32[1,128], index: 4, kind: input, shape index: {}]
  %s5 = inlined_call_operand.hbm [shape: f32[2,16,128], index: 5, kind: output, shape index: {}]
  %s6 = sld [smem:[#allocation0]]
  $region65: #{tpu_custom_call.1} parent=0
    _
  %s8 = ssub.s32 1, %s6
  %s9 = scalar_select 0, %s8, %s6
  $region1: #{tpu_custom_call.1} parent=0
    #allocation2 [shape = 'u8[16384]{0}', space=vmem, size = 0x4000, scoped, tag = 'input window, operand 0']
    #allocation3 [shape = 's32[2]{0}', space=sflag, size = 0x8, scoped, tag = 'scoped memory for tpu_custom_call.1']
    #allocation4 [shape = 's32[2]{0}', space=sflag, size = 0x8, scoped, tag = 'scoped memory for tpu_custom_call.1']
    #allocation5 [shape = 'u8[196608]{0}', space=vmem, size = 0x30000, scoped, tag = 'input window, operand 1, single buffered']
    #allocation6 [shape = 's32[1]{0}', space=sflag, size = 0x4, scoped, tag = 'scoped memory for tpu_custom_call.1']
    #allocation7 [shape = 'u8[65536]{0}', space=vmem, size = 0x10000, scoped, tag = 'input window, operand 3, single buffered']
    #allocation8 [shape = 'u8[16384]{0}', space=vmem, size = 0x4000, scoped, tag = 'output window, operand 0']
    %10 = vsyncpa [#allocation3], 0
    %s11 = scalar_lea.sflag [#allocation3], 1
    %12 = vsyncpa %s11, 0
    %13 = vsyncpa [#allocation6], 0
    %14 = vsyncpa [#allocation4], 0
    %s15 = scalar_lea.sflag [#allocation4], 1
    %16 = vsyncpa %s15, 0
    loop: start=0, step=1, limit=4
    $region2: #{tpu_custom_call.1} parent=1 // loop_pre_header
      _
    $region3: #{tpu_custom_call.1} parent=1 // loop_header
      %s18 = sphi 0, %s22
      %p19 = scmp.ge.s32.totalorder %s18, 4
      %s28 = sphi 0, %s30
      %s31 = sphi 0, %s28
      %s32 = sphi 0, %s31
      %s48 = sphi 0, %s32
      %s52 = sphi 0, %s52
      %s54 = sphi 0, %s52
      %s55 = sphi 0, %s54
      %s69 = sphi 0, %s55
      %s73 = sphi 0, %s73
      %s75 = sphi 0, %s73
      %s76 = sphi 0, %s75
      %s90 = sphi 0, %s76
      %s94 = sphi 0, %s94
      %s96 = sphi 0, %s94
      %s97 = sphi 0, %s96
      %s111 = sphi 0, %s97
      %s115 = sphi 0, %s115
      %s117 = sphi 0, %s115
      %s118 = sphi 0, %s117
      %s132 = sphi 0, %s118
      %s138 = sphi 0, %s140
      %s141 = sphi 0, %s138
      %s142 = sphi 0, %s141
      %s158 = sphi 0, %s142
    $region4: #{tpu_custom_call.1} parent=1 // loop_header_branch
      %21 = sbr.rel (%p19) target = $region8
    $region5: #{tpu_custom_call.1} parent=1 // loop_body
      %s23 = ssub.s32 %s18, 1
      %s24 = ssub.s32 %s18, 2
      %s25 = sadd.s32 %s18, 1
      %s26 = ssub.s32 %s18, %s25
      %p27 = scmp.eq.s32.totalorder %s26, 0
      %s29 = sadd.s32 %s28, 1
      %s30 = scalar_select %p27, %s28, %s29
      %p33 = pneg %p27
      %p34 = scmp.eq.s32.totalorder %s18, 1
      %p35 = por %p33, %p34
      %p36 = scmp.ne.s32.totalorder %s28, %s31
      %p37 = scmp.eq.s32.totalorder %s18, 0
      %p38 = por %p36, %p37
      %p39 = scmp.ne.s32.totalorder %s28, %s31
      %p40 = scmp.eq.s32.totalorder %s23, 1
      %p41 = por %p39, %p40
      %p42 = scmp.ne.s32.totalorder %s31, %s32
      %p43 = scmp.eq.s32.totalorder %s23, 0
      %p44 = por %p42, %p43
      %p45 = scmp.ne.s32.totalorder %s31, %s32
      %p46 = scmp.eq.s32.totalorder %s24, 1
      %p47 = por %p45, %p46
      %p49 = scmp.ne.s32.totalorder %s32, %s48
      %p50 = scmp.eq.s32.totalorder %s24, 0
      %p51 = por %p49, %p50
      %s53 = sadd.s32 %s52, 1
      %p56 = scmp.eq.s32.totalorder %s18, 1
      %p57 = scmp.ne.s32.totalorder %s52, %s54
      %p58 = scmp.eq.s32.totalorder %s18, 0
      %p59 = por %p57, %p58
      %p60 = scmp.ne.s32.totalorder %s52, %s54
      %p61 = scmp.eq.s32.totalorder %s23, 1
      %p62 = por %p60, %p61
      %p63 = scmp.ne.s32.totalorder %s54, %s55
      %p64 = scmp.eq.s32.totalorder %s23, 0
      %p65 = por %p63, %p64
      %p66 = scmp.ne.s32.totalorder %s54, %s55
      %p67 = scmp.eq.s32.totalorder %s24, 1
      %p68 = por %p66, %p67
      %p70 = scmp.ne.s32.totalorder %s55, %s69
      %p71 = scmp.eq.s32.totalorder %s24, 0
      %p72 = por %p70, %p71
      %s74 = sadd.s32 %s73, 1
      %p77 = scmp.eq.s32.totalorder %s18, 1
      %p78 = scmp.ne.s32.totalorder %s73, %s75
      %p79 = scmp.eq.s32.totalorder %s18, 0
      %p80 = por %p78, %p79
      %p81 = scmp.ne.s32.totalorder %s73, %s75
      %p82 = scmp.eq.s32.totalorder %s23, 1
      %p83 = por %p81, %p82
      %p84 = scmp.ne.s32.totalorder %s75, %s76
      %p85 = scmp.eq.s32.totalorder %s23, 0
      %p86 = por %p84, %p85
      %p87 = scmp.ne.s32.totalorder %s75, %s76
      %p88 = scmp.eq.s32.totalorder %s24, 1
      %p89 = por %p87, %p88
      %p91 = scmp.ne.s32.totalorder %s76, %s90
      %p92 = scmp.eq.s32.totalorder %s24, 0
      %p93 = por %p91, %p92
      %s95 = sadd.s32 %s94, 1
      %p98 = scmp.eq.s32.totalorder %s18, 1
      %p99 = scmp.ne.s32.totalorder %s94, %s96
      %p100 = scmp.eq.s32.totalorder %s18, 0
      %p101 = por %p99, %p100
      %p102 = scmp.ne.s32.totalorder %s94, %s96
      %p103 = scmp.eq.s32.totalorder %s23, 1
      %p104 = por %p102, %p103
      %p105 = scmp.ne.s32.totalorder %s96, %s97
      %p106 = scmp.eq.s32.totalorder %s23, 0
      %p107 = por %p105, %p106
      %p108 = scmp.ne.s32.totalorder %s96, %s97
      %p109 = scmp.eq.s32.totalorder %s24, 1
      %p110 = por %p108, %p109
      %p112 = scmp.ne.s32.totalorder %s97, %s111
      %p113 = scmp.eq.s32.totalorder %s24, 0
      %p114 = por %p112, %p113
      %s116 = sadd.s32 %s115, 1
      %p119 = scmp.eq.s32.totalorder %s18, 1
      %p120 = scmp.ne.s32.totalorder %s115, %s117
      %p121 = scmp.eq.s32.totalorder %s18, 0
      %p122 = por %p120, %p121
      %p123 = scmp.ne.s32.totalorder %s115, %s117
      %p124 = scmp.eq.s32.totalorder %s23, 1
      %p125 = por %p123, %p124
      %p126 = scmp.ne.s32.totalorder %s117, %s118
      %p127 = scmp.eq.s32.totalorder %s23, 0
      %p128 = por %p126, %p127
      %p129 = scmp.ne.s32.totalorder %s117, %s118
      %p130 = scmp.eq.s32.totalorder %s24, 1
      %p131 = por %p129, %p130
      %p133 = scmp.ne.s32.totalorder %s118, %s132
      %p134 = scmp.eq.s32.totalorder %s24, 0
      %p135 = por %p133, %p134
      %s136 = ssub.s32 %s18, %s25
      %p137 = scmp.eq.s32.totalorder %s136, 0
      %s139 = sadd.s32 %s138, 1
      %s140 = scalar_select %p137, %s138, %s139
      %p143 = pneg %p137
      %p144 = scmp.eq.s32.totalorder %s18, 1
      %p145 = por %p143, %p144
      %p146 = scmp.ne.s32.totalorder %s138, %s141
      %p147 = scmp.eq.s32.totalorder %s18, 0
      %p148 = por %p146, %p147
      %p149 = scmp.ne.s32.totalorder %s138, %s141
      %p150 = scmp.eq.s32.totalorder %s23, 1
      %p151 = por %p149, %p150
      %p152 = scmp.ne.s32.totalorder %s141, %s142
      %p153 = scmp.eq.s32.totalorder %s23, 0
      %p154 = por %p152, %p153
      %p155 = scmp.ne.s32.totalorder %s141, %s142
      %p156 = scmp.eq.s32.totalorder %s24, 1
      %p157 = por %p155, %p156
      %p159 = scmp.ne.s32.totalorder %s142, %s158
      %p160 = scmp.eq.s32.totalorder %s24, 0
      %p161 = por %p159, %p160
      %p162 = scmp.le.s32.totalorder 1, %s18
      %p163 = scmp.lt.s32.totalorder %s18, 3
      %p164 = pnand %p162, %p163
      %p165 = pneg %p164
      // Predicated region
      $region9: #{tpu_custom_call.1} parent=5 // pred_check
        _
      $region10: #{tpu_custom_call.1} parent=5 // pred_check_branch
        %167 = sbr.rel (%p164) target = $region12
      $region11: #{tpu_custom_call.1} parent=5 // pred_region
        %s168 = ssub.s32 %s18, 1
        // Predicated region
        $region13: #{tpu_custom_call.1} parent=11 // pred_check
          %p169 = pneg %p65
        $region14: #{tpu_custom_call.1} parent=11 // pred_check_branch
          %171 = sbr.rel (%p169) target = $region16
        $region15: #{tpu_custom_call.1} parent=11 // pred_region
          %s173 = ssub.s32 6144, 6144
          %174 = vsyncadd [#allocation6], %s173
          %s175 = sshll.u32 [#allocation5], 4
          %s176 = int_to_ptr.vmem [resolvable:$true] %s175
          %181 = dma.hbm_to_vmem [thread:$0]  %s1, 6144, %s176, [#allocation6], 128, 128, 8
        $region16: #{tpu_custom_call.1} parent=11 // pred_fallthru
          _
        // Predicated region
        $region17: #{tpu_custom_call.1} parent=11 // pred_check
          %p182 = pneg %p86
        $region18: #{tpu_custom_call.1} parent=11 // pred_check_branch
          %184 = sbr.rel (%p182) target = $region20
        $region19: #{tpu_custom_call.1} parent=11 // pred_region
          _
        $region20: #{tpu_custom_call.1} parent=11 // pred_fallthru
          _
        // Predicated region
        $region21: #{tpu_custom_call.1} parent=11 // pred_check
          %p185 = pneg %p107
        $region22: #{tpu_custom_call.1} parent=11 // pred_check_branch
          %187 = sbr.rel (%p185) target = $region24
        $region23: #{tpu_custom_call.1} parent=11 // pred_region
          %s189 = ssub.s32 2048, 2048
          %190 = vsyncadd [#allocation6], %s189
          %s191 = sshll.u32 [#allocation7], 4
          %s192 = int_to_ptr.vmem [resolvable:$true] %s191
          %197 = dma.hbm_to_vmem [thread:$0]  %s3, 2048, %s192, [#allocation6], 128, 128, 8
        $region24: #{tpu_custom_call.1} parent=11 // pred_fallthru
          _
        // Predicated region
        $region25: #{tpu_custom_call.1} parent=11 // pred_check
          %p198 = pneg %p128
        $region26: #{tpu_custom_call.1} parent=11 // pred_check_branch
          %200 = sbr.rel (%p198) target = $region28
        $region27: #{tpu_custom_call.1} parent=11 // pred_region
          _
        $region28: #{tpu_custom_call.1} parent=11 // pred_fallthru
          _
      $region12: #{tpu_custom_call.1} parent=5 // pred_fallthru
        _
      %p201 = scmp.lt.s32.totalorder %s18, 2
      // Predicated region
      $region29: #{tpu_custom_call.1} parent=5 // pred_check
        %p202 = pneg %p201
      $region30: #{tpu_custom_call.1} parent=5 // pred_check_branch
        %204 = sbr.rel (%p202) target = $region32
      $region31: #{tpu_custom_call.1} parent=5 // pred_region
        // Predicated region
        $region33: #{tpu_custom_call.1} parent=31 // pred_check
          %p205 = pneg %p38
        $region34: #{tpu_custom_call.1} parent=31 // pred_check_branch
          %207 = sbr.rel (%p205) target = $region36
        $region35: #{tpu_custom_call.1} parent=31 // pred_region
          %s208 = sand.u32 %s28, 1
          %s209 = scalar_lea.sflag [#allocation3], %s208
          %s210 = sand.u32 %s28, 1
          %s211 = smul.addr %s210, 16
          %s212 = scalar_lea.vmem [#allocation2], %s211
          %s214 = ssub.s32 256, 256
          %215 = vsyncadd %s209, %s214
          %s216 = smul.addr %s18, 2
          %s217 = smul.addr %s216, 128
          %s218 = scalar_lea.hbm %s0, %s217
          %s219 = sshll.u32 %s212, 4
          %s220 = int_to_ptr.vmem [resolvable:$true] %s219
          %225 = dma.hbm_to_vmem [thread:$0]  %s218, 256, %s220, %s209, 128, 128, 8
        $region36: #{tpu_custom_call.1} parent=31 // pred_fallthru
          _
      $region32: #{tpu_custom_call.1} parent=5 // pred_fallthru
        _
      %p226 = scmp.le.s32.totalorder 1, %s18
      %p227 = scmp.lt.s32.totalorder %s18, 3
      %p228 = pnand %p226, %p227
      %p229 = pneg %p228
      // Predicated region
      $region37: #{tpu_custom_call.1} parent=5 // pred_check
        _
      $region38: #{tpu_custom_call.1} parent=5 // pred_check_branch
        %231 = sbr.rel (%p228) target = $region40
      $region39: #{tpu_custom_call.1} parent=5 // pred_region
        %s232 = ssub.s32 %s18, 1
        %s233 = sand.u32 %s31, 1
        %s234 = scalar_lea.sflag [#allocation3], %s233
        %s235 = sand.u32 %s31, 1
        %s236 = smul.addr %s235, 16
        %s237 = scalar_lea.vmem [#allocation2], %s236
        // Predicated region
        $region41: #{tpu_custom_call.1} parent=39 // pred_check
          %p238 = pneg %p44
        $region42: #{tpu_custom_call.1} parent=39 // pred_check_branch
          %240 = sbr.rel (%p238) target = $region44
        $region43: #{tpu_custom_call.1} parent=39 // pred_region
          %241 = dma.done %s234, 256
        $region44: #{tpu_custom_call.1} parent=39 // pred_fallthru
          _
        // Predicated region
        $region45: #{tpu_custom_call.1} parent=39 // pred_check
          %p242 = pneg %p65
        $region46: #{tpu_custom_call.1} parent=39 // pred_check_branch
          %244 = sbr.rel (%p242) target = $region48
        $region47: #{tpu_custom_call.1} parent=39 // pred_region
          %245 = dma.done [#allocation6], 6144
        $region48: #{tpu_custom_call.1} parent=39 // pred_fallthru
          _
        // Predicated region
        $region49: #{tpu_custom_call.1} parent=39 // pred_check
          %p246 = pneg %p107
        $region50: #{tpu_custom_call.1} parent=39 // pred_check_branch
          %248 = sbr.rel (%p246) target = $region52
        $region51: #{tpu_custom_call.1} parent=39 // pred_region
          %249 = dma.done [#allocation6], 2048
        $region52: #{tpu_custom_call.1} parent=39 // pred_fallthru
          _
        %s250 = sand.u32 %s31, 1
        %s251 = scalar_lea.sflag [#allocation3], %s250
        %s252 = sand.u32 %s31, 1
        %s253 = smul.addr %s252, 16
        %s254 = scalar_lea.vmem [#allocation2], %s253
        %p255 = pneg %p44
        %p256 = pneg %p41
        %p257 = pneg %p65
        %p258 = pneg %p62
        %p259 = pneg %p86
        %p260 = pneg %p83
        %p261 = pneg %p107
        %p262 = pneg %p104
        %p263 = pneg %p128
        %p264 = pneg %p125
        %p265 = pneg %p154
        %p266 = pneg %p151
        %s267 = sand.u32 %s141, 1
        %s268 = scalar_lea.sflag [#allocation4], %s267
        %s269 = sand.u32 %s141, 1
        %s270 = smul.addr %s269, 16
        %s271 = scalar_lea.vmem [#allocation8], %s270
        %v272 = vld [vmem:[%s237] sm:$0xff]
        %v273 = vld [vmem:[%s237 + $0x8] sm:$0xff]
        %v274 = vld [vmem:[#allocation5] sm:$0xff]
        %v275 = vld [vmem:[#allocation5 + $0x8] sm:$0xff]
        %v276 = vld [vmem:[#allocation5 + $0x10] sm:$0xff]
        %v277 = vld [vmem:[#allocation5 + $0x18] sm:$0xff]
        %v278 = vld [vmem:[#allocation5 + $0x20] sm:$0xff]
        %v279 = vld [vmem:[#allocation5 + $0x28] sm:$0xff]
        %v280 = vld [vmem:[#allocation5 + $0x30] sm:$0xff]
        %v281 = vld [vmem:[#allocation5 + $0x38] sm:$0xff]
        %v282 = vld [vmem:[#allocation5 + $0x40] sm:$0xff]
        %v283 = vld [vmem:[#allocation5 + $0x48] sm:$0xff]
        %v284 = vld [vmem:[#allocation5 + $0x50] sm:$0xff]
        %v285 = vld [vmem:[#allocation5 + $0x58] sm:$0xff]
        %v286 = vld [vmem:[#allocation5 + $0x60] sm:$0xff]
        %v287 = vld [vmem:[#allocation5 + $0x68] sm:$0xff]
        %v288 = vld [vmem:[#allocation5 + $0x70] sm:$0xff]
        %v289 = vld [vmem:[#allocation5 + $0x78] sm:$0xff]
        %v290 = vld [vmem:[#allocation5 + $0x80] sm:$0xff]
        %v291 = vld [vmem:[#allocation5 + $0x88] sm:$0xff]
        %v292 = vld [vmem:[#allocation5 + $0x90] sm:$0xff]
        %v293 = vld [vmem:[#allocation5 + $0x98] sm:$0xff]
        %v294 = vld [vmem:[#allocation5 + $0xa0] sm:$0xff]
        %v295 = vld [vmem:[#allocation5 + $0xa8] sm:$0xff]
        %v296 = vld [vmem:[#allocation5 + $0xb0] sm:$0xff]
        %v297 = vld [vmem:[#allocation5 + $0xb8] sm:$0xff]
        %v298 = vld [vmem:[#allocation5 + $0xc0] sm:$0xff]
        %v299 = vld [vmem:[#allocation5 + $0xc8] sm:$0xff]
        %v300 = vld [vmem:[#allocation5 + $0xd0] sm:$0xff]
        %v301 = vld [vmem:[#allocation5 + $0xd8] sm:$0xff]
        %v302 = vld [vmem:[#allocation5 + $0xe0] sm:$0xff]
        %v303 = vld [vmem:[#allocation5 + $0xe8] sm:$0xff]
        %v304 = vld [vmem:[#allocation5 + $0xf0] sm:$0xff]
        %v305 = vld [vmem:[#allocation5 + $0xf8] sm:$0xff]
        %v306 = vld [vmem:[#allocation5 + $0x100] sm:$0xff]
        %v307 = vld [vmem:[#allocation5 + $0x108] sm:$0xff]
        %v308 = vld [vmem:[#allocation5 + $0x110] sm:$0xff]
        %v309 = vld [vmem:[#allocation5 + $0x118] sm:$0xff]
        %v310 = vld [vmem:[#allocation5 + $0x120] sm:$0xff]
        %v311 = vld [vmem:[#allocation5 + $0x128] sm:$0xff]
        %v312 = vld [vmem:[#allocation5 + $0x130] sm:$0xff]
        %v313 = vld [vmem:[#allocation5 + $0x138] sm:$0xff]
        %v314 = vld [vmem:[#allocation5 + $0x140] sm:$0xff]
        %v315 = vld [vmem:[#allocation5 + $0x148] sm:$0xff]
        %v316 = vld [vmem:[#allocation5 + $0x150] sm:$0xff]
        %v317 = vld [vmem:[#allocation5 + $0x158] sm:$0xff]
        %v318 = vld [vmem:[#allocation5 + $0x160] sm:$0xff]
        %v319 = vld [vmem:[#allocation5 + $0x168] sm:$0xff]
        %v320 = vld [vmem:[#allocation5 + $0x170] sm:$0xff]
        %v321 = vld [vmem:[#allocation5 + $0x178] sm:$0xff]
        %v322 = vld [vmem:[%s2] sm:$0x7]
        %v324 = vlaneseq
        %v325 = vshrl.u32 %v324, 7
        %v326 = vsub.s32 0, %v325
        %v327 = vrot.slane %v322, %v326
        %v328 = vlaneseq
        %v329 = vshrl.u32 %v328, 7
        %v330 = vsub.s32 1, %v329
        %v331 = vrot.slane %v322, %v330
        %v332 = vlaneseq
        %v333 = vshrl.u32 %v332, 7
        %v334 = vsub.s32 2, %v333
        %v335 = vrot.slane %v322, %v334
        %339 = vmatprep.subr.mxu0 0.0
        %340 = vmatpush1.xpose.msra.mxu0 %v289
        %341 = vmatprep.subr.mxu0 0.0
        %342 = vmatpush1.xpose.msra.mxu0 %v288
        %343 = vmatprep.subr.mxu0 0.0
        %344 = vmatpush1.xpose.msra.mxu0 %v287
        %345 = vmatprep.subr.mxu0 0.0
        %346 = vmatpush1.xpose.msra.mxu0 %v286
        %347 = vmatprep.subr.mxu0 0.0
        %348 = vmatpush1.xpose.msra.mxu0 %v285
        %349 = vmatprep.subr.mxu0 0.0
        %350 = vmatpush1.xpose.msra.mxu0 %v284
        %351 = vmatprep.subr.mxu0 0.0
        %352 = vmatpush1.xpose.msra.mxu0 %v283
        %353 = vmatprep.subr.mxu0 0.0
        %354 = vmatpush1.xpose.msra.mxu0 %v282
        %355 = vmatprep.subr.mxu0 0.0
        %356 = vmatpush1.xpose.msra.mxu0 %v281
        %357 = vmatprep.subr.mxu0 0.0
        %358 = vmatpush1.xpose.msra.mxu0 %v280
        %359 = vmatprep.subr.mxu0 0.0
        %360 = vmatpush1.xpose.msra.mxu0 %v279
        %361 = vmatprep.subr.mxu0 0.0
        %362 = vmatpush1.xpose.msra.mxu0 %v278
        %363 = vmatprep.subr.mxu0 0.0
        %364 = vmatpush1.xpose.msra.mxu0 %v277
        %365 = vmatprep.subr.mxu0 0.0
        %366 = vmatpush1.xpose.msra.mxu0 %v276
        %367 = vmatprep.subr.mxu0 0.0
        %368 = vmatpush1.xpose.msra.mxu0 %v275
        %369 = vmatprep.subr.mxu0 0.0
        %370 = vmatpush1.xpose.msra.mxu0 %v274
        %371 = vmatprep.subr.mxu0 0.0
        %372 = vmatpush2.xpose.msra.mxu0 %v305
        %373 = vmatprep.subr.mxu0 0.0
        %374 = vmatpush2.xpose.msra.mxu0 %v304
        %375 = vmatprep.subr.mxu0 0.0
        %376 = vmatpush2.xpose.msra.mxu0 %v303
        %377 = vmatprep.subr.mxu0 0.0
        %378 = vmatpush2.xpose.msra.mxu0 %v302
        %379 = vmatprep.subr.mxu0 0.0
        %380 = vmatpush2.xpose.msra.mxu0 %v301
        %381 = vmatprep.subr.mxu0 0.0
        %382 = vmatpush2.xpose.msra.mxu0 %v300
        %383 = vmatprep.subr.mxu0 0.0
        %384 = vmatpush2.xpose.msra.mxu0 %v299
        %385 = vmatprep.subr.mxu0 0.0
        %386 = vmatpush2.xpose.msra.mxu0 %v298
        %387 = vmatprep.subr.mxu0 0.0
        %388 = vmatpush2.xpose.msra.mxu0 %v297
        %389 = vmatprep.subr.mxu0 0.0
        %390 = vmatpush2.xpose.msra.mxu0 %v296
        %391 = vmatprep.subr.mxu0 0.0
        %392 = vmatpush2.xpose.msra.mxu0 %v295
        %393 = vmatprep.subr.mxu0 0.0
        %394 = vmatpush2.xpose.msra.mxu0 %v294
        %395 = vmatprep.subr.mxu0 0.0
        %396 = vmatpush2.xpose.msra.mxu0 %v293
        %397 = vmatprep.subr.mxu0 0.0
        %398 = vmatpush2.xpose.msra.mxu0 %v292
        %399 = vmatprep.subr.mxu0 0.0
        %400 = vmatpush2.xpose.msra.mxu0 %v291
        %401 = vmatprep.subr.mxu0 0.0
        %402 = vmatpush2.xpose.msra.mxu0 %v290
        %403 = vmatprep.mubr.f32.mxu0 0.0
        %404 = vmatmul.mubr.f32.gmra.mxu0 %v272
        %v405 = vpop.f32.mrf.mxu0
        %v406 = vadd.f32 %v327, %v405
        %v407 = vpop.f32.mrf.mxu0
        %v408 = vadd.f32 %v331, %v407
        %409 = vmatprep.mubr.f32.mxu0 0.0
        %410 = vmatmul.mubr.f32.gmra.mxu0 %v273
        %v411 = vpop.f32.mrf.mxu0
        %v412 = vadd.f32 %v327, %v411
        %v413 = vpop.f32.mrf.mxu0
        %v414 = vadd.f32 %v331, %v413
        %415 = vdwg.mxu0
        %416 = vmatprep.subr.mxu0 0.0
        %417 = vmatpush1.xpose.msra.mxu0 %v321
        %418 = vmatprep.subr.mxu0 0.0
        %419 = vmatpush1.xpose.msra.mxu0 %v320
        %420 = vmatprep.subr.mxu0 0.0
        %421 = vmatpush1.xpose.msra.mxu0 %v319
        %422 = vmatprep.subr.mxu0 0.0
        %423 = vmatpush1.xpose.msra.mxu0 %v318
        %424 = vmatprep.subr.mxu0 0.0
        %425 = vmatpush1.xpose.msra.mxu0 %v317
        %426 = vmatprep.subr.mxu0 0.0
        %427 = vmatpush1.xpose.msra.mxu0 %v316
        %428 = vmatprep.subr.mxu0 0.0
        %429 = vmatpush1.xpose.msra.mxu0 %v315
        %430 = vmatprep.subr.mxu0 0.0
        %431 = vmatpush1.xpose.msra.mxu0 %v314
        %432 = vmatprep.subr.mxu0 0.0
        %433 = vmatpush1.xpose.msra.mxu0 %v313
        %434 = vmatprep.subr.mxu0 0.0
        %435 = vmatpush1.xpose.msra.mxu0 %v312
        %436 = vmatprep.subr.mxu0 0.0
        %437 = vmatpush1.xpose.msra.mxu0 %v311
        %438 = vmatprep.subr.mxu0 0.0
        %439 = vmatpush1.xpose.msra.mxu0 %v310
        %440 = vmatprep.subr.mxu0 0.0
        %441 = vmatpush1.xpose.msra.mxu0 %v309
        %442 = vmatprep.subr.mxu0 0.0
        %443 = vmatpush1.xpose.msra.mxu0 %v308
        %444 = vmatprep.subr.mxu0 0.0
        %445 = vmatpush1.xpose.msra.mxu0 %v307
        %446 = vmatprep.subr.mxu0 0.0
        %447 = vmatpush1.xpose.msra.mxu0 %v306
        %448 = vmatprep.subr.mxu0 0.0
        %449 = vmatpush2.xpose.msra.mxu0 0.0
        %450 = vmatprep.subr.mxu0 0.0
        %451 = vmatpush2.xpose.msra.mxu0 0.0
        %452 = vmatprep.subr.mxu0 0.0
        %453 = vmatpush2.xpose.msra.mxu0 0.0
        %454 = vmatprep.subr.mxu0 0.0
        %455 = vmatpush2.xpose.msra.mxu0 0.0
        %456 = vmatprep.subr.mxu0 0.0
        %457 = vmatpush2.xpose.msra.mxu0 0.0
        %458 = vmatprep.subr.mxu0 0.0
        %459 = vmatpush2.xpose.msra.mxu0 0.0
        %460 = vmatprep.subr.mxu0 0.0
        %461 = vmatpush2.xpose.msra.mxu0 0.0
        %462 = vmatprep.subr.mxu0 0.0
        %463 = vmatpush2.xpose.msra.mxu0 0.0
        %464 = vmatprep.subr.mxu0 0.0
        %465 = vmatpush2.xpose.msra.mxu0 0.0
        %466 = vmatprep.subr.mxu0 0.0
        %467 = vmatpush2.xpose.msra.mxu0 0.0
        %468 = vmatprep.subr.mxu0 0.0
        %469 = vmatpush2.xpose.msra.mxu0 0.0
        %470 = vmatprep.subr.mxu0 0.0
        %471 = vmatpush2.xpose.msra.mxu0 0.0
        %472 = vmatprep.subr.mxu0 0.0
        %473 = vmatpush2.xpose.msra.mxu0 0.0
        %474 = vmatprep.subr.mxu0 0.0
        %475 = vmatpush2.xpose.msra.mxu0 0.0
        %476 = vmatprep.subr.mxu0 0.0
        %477 = vmatpush2.xpose.msra.mxu0 0.0
        %478 = vmatprep.subr.mxu0 0.0
        %479 = vmatpush2.xpose.msra.mxu0 0.0
        %480 = vmatprep.mubr.f32.mxu0 0.0
        %481 = vmatmul.mubr.f32.gmra.mxu0 %v272
        %v482 = vpop.f32.mrf.mxu0
        %v483 = vadd.f32 %v335, %v482
        %v484 = vpop.f32.mrf.mxu0
        %485 = vmatprep.mubr.f32.mxu0 0.0
        %486 = vmatmul.mubr.f32.gmra.mxu0 %v273
        %v487 = vpop.f32.mrf.mxu0
        %v488 = vadd.f32 %v335, %v487
        %v489 = vpop.f32.mrf.mxu0
        %490 = vdwg.mxu0
        %vm491 = vcmask 261120
        %v493 = vsel %vm491, %v406, 0
        %v496 = vsel %vm491, %v412, 0
        %v499 = vsel %vm491, %v408, 0
        %v502 = vsel %vm491, %v414, 0
        %504 = vmatprep.subr.mxu0 0.0
        %505 = vmatpush1.xpose.msra.mxu0 0.0
        %506 = vmatprep.subr.mxu0 0.0
        %507 = vmatpush1.xpose.msra.mxu0 0.0
        %508 = vmatprep.subr.mxu0 0.0
        %509 = vmatpush1.xpose.msra.mxu0 0.0
        %510 = vmatprep.subr.mxu0 0.0
        %511 = vmatpush1.xpose.msra.mxu0 0.0
        %512 = vmatprep.subr.mxu0 0.0
        %513 = vmatpush1.xpose.msra.mxu0 0.0
        %514 = vmatprep.subr.mxu0 0.0
        %515 = vmatpush1.xpose.msra.mxu0 0.0
        %516 = vmatprep.subr.mxu0 0.0
        %517 = vmatpush1.xpose.msra.mxu0 0.0
        %518 = vmatprep.subr.mxu0 0.0
        %519 = vmatpush1.xpose.msra.mxu0 0.0
        %520 = vmatprep.subr.mxu0 0.0
        %521 = vmatpush1.xpose.msra.mxu0 0.0
        %522 = vmatprep.subr.mxu0 0.0
        %523 = vmatpush1.xpose.msra.mxu0 0.0
        %524 = vmatprep.subr.mxu0 0.0
        %525 = vmatpush1.xpose.msra.mxu0 0.0
        %526 = vmatprep.subr.mxu0 0.0
        %527 = vmatpush1.xpose.msra.mxu0 0.0
        %528 = vmatprep.subr.mxu0 0.0
        %529 = vmatpush1.xpose.msra.mxu0 0.0
        %530 = vmatprep.subr.mxu0 0.0
        %531 = vmatpush1.xpose.msra.mxu0 0.0
        %532 = vmatprep.subr.mxu0 0.0
        %533 = vmatpush1.xpose.msra.mxu0 %v502
        %534 = vmatprep.subr.mxu0 0.0
        %535 = vmatpush1.xpose.msra.mxu0 %v499
        %536 = vmatprep.subr.mxu0 0.0
        %537 = vmatpush2.xpose.msra.mxu0 0.0
        %538 = vmatprep.subr.mxu0 0.0
        %539 = vmatpush2.xpose.msra.mxu0 0.0
        %540 = vmatprep.subr.mxu0 0.0
        %541 = vmatpush2.xpose.msra.mxu0 0.0
        %542 = vmatprep.subr.mxu0 0.0
        %543 = vmatpush2.xpose.msra.mxu0 0.0
        %544 = vmatprep.subr.mxu0 0.0
        %545 = vmatpush2.xpose.msra.mxu0 0.0
        %546 = vmatprep.subr.mxu0 0.0
        %547 = vmatpush2.xpose.msra.mxu0 0.0
        %548 = vmatprep.subr.mxu0 0.0
        %549 = vmatpush2.xpose.msra.mxu0 0.0
        %550 = vmatprep.subr.mxu0 0.0
        %551 = vmatpush2.xpose.msra.mxu0 0.0
        %552 = vmatprep.subr.mxu0 0.0
        %553 = vmatpush2.xpose.msra.mxu0 0.0
        %554 = vmatprep.subr.mxu0 0.0
        %555 = vmatpush2.xpose.msra.mxu0 0.0
        %556 = vmatprep.subr.mxu0 0.0
        %557 = vmatpush2.xpose.msra.mxu0 0.0
        %558 = vmatprep.subr.mxu0 0.0
        %559 = vmatpush2.xpose.msra.mxu0 0.0
        %560 = vmatprep.subr.mxu0 0.0
        %561 = vmatpush2.xpose.msra.mxu0 0.0
        %562 = vmatprep.subr.mxu0 0.0
        %563 = vmatpush2.xpose.msra.mxu0 0.0
        %564 = vmatprep.subr.mxu0 0.0
        %565 = vmatpush2.xpose.msra.mxu0 0.0
        %566 = vmatprep.subr.mxu0 0.0
        %567 = vmatpush2.xpose.msra.mxu0 0.0
        %568 = vmatprep.mubr.f32.mxu0 0.0
        %569 = vmatmul.mubr.f32.gmra.mxu0 %v493
        %v570 = vpop.f32.mrf.mxu0
        %v571 = vadd.f32 0.0, %v570
        %v572 = vpop.f32.mrf.mxu0
        %573 = vmatprep.mubr.f32.mxu0 0.0
        %574 = vmatmul.mubr.f32.gmra.mxu0 %v496
        %v575 = vpop.f32.mrf.mxu0
        %v576 = vadd.f32 0.0, %v575
        %v577 = vpop.f32.mrf.mxu0
        %578 = vdwg.mxu0
        %v579 = vmul.f32 %v571, 0.17677669
        %v580 = vmul.f32 %v576, 0.17677669
        %vm581 = vcmask 130048
        %v582 = vsel %vm581, %v579, -inf
        %583 = vmax.xlane.f32.xlu0 %v582
        %v584 = vpop.xlane.xlu0 %583
        %v585 = vsel %vm581, %v580, -inf
        %586 = vmax.xlane.f32.xlu0 %v585
        %v587 = vpop.xlane.xlu0 %586
        %v588 = vsub.f32 %v579, %v584
        %v589 = vsub.f32 %v580, %v587
        %v590 = vmul.f32 %v588, 1.442695
        %v591 = vpow.pop %v590
        %v592 = vmul.f32 %v589, 1.442695
        %v593 = vpow.pop %v592
        %v594 = vsel %vm581, %v591, 0.0
        %595 = vadd.xlane.f32.xlu0 %v594
        %v596 = vpop.xlane.xlu0 %595
        %v597 = vsel %vm581, %v593, 0.0
        %598 = vadd.xlane.f32.xlu0 %v597
        %v599 = vpop.xlane.xlu0 %598
        %v600 = vrcp.pop %v596
        %v601 = vmul.f32 %v591, %v600
        %v602 = vrcp.pop %v599
        %v603 = vmul.f32 %v593, %v602
        %v605 = vsel %vm581, %v601, 0
        %v608 = vsel %vm581, %v603, 0
        %610 = vmatprep.subr.mxu0 0.0
        %611 = vmatpush1.msra.mxu0 0.0
        %612 = vmatprep.subr.mxu0 0.0
        %613 = vmatpush1.msra.mxu0 0.0
        %614 = vmatprep.subr.mxu0 0.0
        %615 = vmatpush1.msra.mxu0 0.0
        %616 = vmatprep.subr.mxu0 0.0
        %617 = vmatpush1.msra.mxu0 0.0
        %618 = vmatprep.subr.mxu0 0.0
        %619 = vmatpush1.msra.mxu0 0.0
        %620 = vmatprep.subr.mxu0 0.0
        %621 = vmatpush1.msra.mxu0 0.0
        %622 = vmatprep.subr.mxu0 0.0
        %623 = vmatpush1.msra.mxu0 0.0
        %624 = vmatprep.subr.mxu0 0.0
        %625 = vmatpush1.msra.mxu0 0.0
        %626 = vmatprep.subr.mxu0 0.0
        %627 = vmatpush1.msra.mxu0 0.0
        %628 = vmatprep.subr.mxu0 0.0
        %629 = vmatpush1.msra.mxu0 0.0
        %630 = vmatprep.subr.mxu0 0.0
        %631 = vmatpush1.msra.mxu0 0.0
        %632 = vmatprep.subr.mxu0 0.0
        %633 = vmatpush1.msra.mxu0 0.0
        %634 = vmatprep.subr.mxu0 0.0
        %635 = vmatpush1.msra.mxu0 0.0
        %636 = vmatprep.subr.mxu0 0.0
        %637 = vmatpush1.msra.mxu0 0.0
        %638 = vmatprep.subr.mxu0 0.0
        %639 = vmatpush1.msra.mxu0 %v488
        %640 = vmatprep.subr.mxu0 0.0
        %641 = vmatpush1.msra.mxu0 %v483
        %642 = vmatprep.subr.mxu0 0.0
        %643 = vmatpush2.msra.mxu0 0.0
        %644 = vmatprep.subr.mxu0 0.0
        %645 = vmatpush2.msra.mxu0 0.0
        %646 = vmatprep.subr.mxu0 0.0
        %647 = vmatpush2.msra.mxu0 0.0
        %648 = vmatprep.subr.mxu0 0.0
        %649 = vmatpush2.msra.mxu0 0.0
        %650 = vmatprep.subr.mxu0 0.0
        %651 = vmatpush2.msra.mxu0 0.0
        %652 = vmatprep.subr.mxu0 0.0
        %653 = vmatpush2.msra.mxu0 0.0
        %654 = vmatprep.subr.mxu0 0.0
        %655 = vmatpush2.msra.mxu0 0.0
        %656 = vmatprep.subr.mxu0 0.0
        %657 = vmatpush2.msra.mxu0 0.0
        %658 = vmatprep.subr.mxu0 0.0
        %659 = vmatpush2.msra.mxu0 0.0
        %660 = vmatprep.subr.mxu0 0.0
        %661 = vmatpush2.msra.mxu0 0.0
        %662 = vmatprep.subr.mxu0 0.0
        %663 = vmatpush2.msra.mxu0 0.0
        %664 = vmatprep.subr.mxu0 0.0
        %665 = vmatpush2.msra.mxu0 0.0
        %666 = vmatprep.subr.mxu0 0.0
        %667 = vmatpush2.msra.mxu0 0.0
        %668 = vmatprep.subr.mxu0 0.0
        %669 = vmatpush2.msra.mxu0 0.0
        %670 = vmatprep.subr.mxu0 0.0
        %671 = vmatpush2.msra.mxu0 0.0
        %672 = vmatprep.subr.mxu0 0.0
        %673 = vmatpush2.msra.mxu0 0.0
        %674 = vmatprep.mubr.f32.mxu0 0.0
        %675 = vmatmul.mubr.f32.gmra.mxu0 %v605
        %v676 = vpop.f32.mrf.mxu0
        %v677 = vadd.f32 0.0, %v676
        %v678 = vpop.f32.mrf.mxu0
        %679 = vmatprep.mubr.f32.mxu0 0.0
        %680 = vmatmul.mubr.f32.gmra.mxu0 %v608
        %v681 = vpop.f32.mrf.mxu0
        %v682 = vadd.f32 0.0, %v681
        %v683 = vpop.f32.mrf.mxu0
        %684 = vdwg.mxu0
        %685 = vrot.lane.b32.xlu0 %v406, 96
        %v686 = vpop.permute.xlu0 %685
        %687 = vrot.lane.b32.xlu0 %v412, 96
        %v688 = vpop.permute.xlu0 %687
        %689 = vrot.lane.b32.xlu0 %v408, 96
        %v690 = vpop.permute.xlu0 %689
        %691 = vrot.lane.b32.xlu0 %v414, 96
        %v692 = vpop.permute.xlu0 %691
        %v693 = vsel %vm491, %v686, 0
        %v695 = vsel %vm491, %v688, 0
        %v697 = vsel %vm491, %v690, 0
        %v699 = vsel %vm491, %v692, 0
        %701 = vmatprep.subr.mxu0 0.0
        %702 = vmatpush1.xpose.msra.mxu0 0.0
        %703 = vmatprep.subr.mxu0 0.0
        %704 = vmatpush1.xpose.msra.mxu0 0.0
        %705 = vmatprep.subr.mxu0 0.0
        %706 = vmatpush1.xpose.msra.mxu0 0.0
        %707 = vmatprep.subr.mxu0 0.0
        %708 = vmatpush1.xpose.msra.mxu0 0.0
        %709 = vmatprep.subr.mxu0 0.0
        %710 = vmatpush1.xpose.msra.mxu0 0.0
        %711 = vmatprep.subr.mxu0 0.0
        %712 = vmatpush1.xpose.msra.mxu0 0.0
        %713 = vmatprep.subr.mxu0 0.0
        %714 = vmatpush1.xpose.msra.mxu0 0.0
        %715 = vmatprep.subr.mxu0 0.0
        %716 = vmatpush1.xpose.msra.mxu0 0.0
        %717 = vmatprep.subr.mxu0 0.0
        %718 = vmatpush1.xpose.msra.mxu0 0.0
        %719 = vmatprep.subr.mxu0 0.0
        %720 = vmatpush1.xpose.msra.mxu0 0.0
        %721 = vmatprep.subr.mxu0 0.0
        %722 = vmatpush1.xpose.msra.mxu0 0.0
        %723 = vmatprep.subr.mxu0 0.0
        %724 = vmatpush1.xpose.msra.mxu0 0.0
        %725 = vmatprep.subr.mxu0 0.0
        %726 = vmatpush1.xpose.msra.mxu0 0.0
        %727 = vmatprep.subr.mxu0 0.0
        %728 = vmatpush1.xpose.msra.mxu0 0.0
        %729 = vmatprep.subr.mxu0 0.0
        %730 = vmatpush1.xpose.msra.mxu0 %v699
        %731 = vmatprep.subr.mxu0 0.0
        %732 = vmatpush1.xpose.msra.mxu0 %v697
        %733 = vmatprep.subr.mxu0 0.0
        %734 = vmatpush2.xpose.msra.mxu0 0.0
        %735 = vmatprep.subr.mxu0 0.0
        %736 = vmatpush2.xpose.msra.mxu0 0.0
        %737 = vmatprep.subr.mxu0 0.0
        %738 = vmatpush2.xpose.msra.mxu0 0.0
        %739 = vmatprep.subr.mxu0 0.0
        %740 = vmatpush2.xpose.msra.mxu0 0.0
        %741 = vmatprep.subr.mxu0 0.0
        %742 = vmatpush2.xpose.msra.mxu0 0.0
        %743 = vmatprep.subr.mxu0 0.0
        %744 = vmatpush2.xpose.msra.mxu0 0.0
        %745 = vmatprep.subr.mxu0 0.0
        %746 = vmatpush2.xpose.msra.mxu0 0.0
        %747 = vmatprep.subr.mxu0 0.0
        %748 = vmatpush2.xpose.msra.mxu0 0.0
        %749 = vmatprep.subr.mxu0 0.0
        %750 = vmatpush2.xpose.msra.mxu0 0.0
        %751 = vmatprep.subr.mxu0 0.0
        %752 = vmatpush2.xpose.msra.mxu0 0.0
        %753 = vmatprep.subr.mxu0 0.0
        %754 = vmatpush2.xpose.msra.mxu0 0.0
        %755 = vmatprep.subr.mxu0 0.0
        %756 = vmatpush2.xpose.msra.mxu0 0.0
        %757 = vmatprep.subr.mxu0 0.0
        %758 = vmatpush2.xpose.msra.mxu0 0.0
        %759 = vmatprep.subr.mxu0 0.0
        %760 = vmatpush2.xpose.msra.mxu0 0.0
        %761 = vmatprep.subr.mxu0 0.0
        %762 = vmatpush2.xpose.msra.mxu0 0.0
        %763 = vmatprep.subr.mxu0 0.0
        %764 = vmatpush2.xpose.msra.mxu0 0.0
        %765 = vmatprep.mubr.f32.mxu0 0.0
        %766 = vmatmul.mubr.f32.gmra.mxu0 %v693
        %v767 = vpop.f32.mrf.mxu0
        %v768 = vadd.f32 0.0, %v767
        %v769 = vpop.f32.mrf.mxu0
        %770 = vmatprep.mubr.f32.mxu0 0.0
        %771 = vmatmul.mubr.f32.gmra.mxu0 %v695
        %v772 = vpop.f32.mrf.mxu0
        %v773 = vadd.f32 0.0, %v772
        %v774 = vpop.f32.mrf.mxu0
        %775 = vdwg.mxu0
        %v776 = vmul.f32 %v768, 0.17677669
        %v777 = vmul.f32 %v773, 0.17677669
        %v778 = vsel %vm581, %v776, -inf
        %779 = vmax.xlane.f32.xlu0 %v778
        %v780 = vpop.xlane.xlu0 %779
        %v781 = vsel %vm581, %v777, -inf
        %782 = vmax.xlane.f32.xlu0 %v781
        %v783 = vpop.xlane.xlu0 %782
        %v784 = vsub.f32 %v776, %v780
        %v785 = vsub.f32 %v777, %v783
        %v786 = vmul.f32 %v784, 1.442695
        %v787 = vpow.pop %v786
        %v788 = vmul.f32 %v785, 1.442695
        %v789 = vpow.pop %v788
        %v790 = vsel %vm581, %v787, 0.0
        %791 = vadd.xlane.f32.xlu0 %v790
        %v792 = vpop.xlane.xlu0 %791
        %v793 = vsel %vm581, %v789, 0.0
        %794 = vadd.xlane.f32.xlu0 %v793
        %v795 = vpop.xlane.xlu0 %794
        %v796 = vrcp.pop %v792
        %v797 = vmul.f32 %v787, %v796
        %v798 = vrcp.pop %v795
        %v799 = vmul.f32 %v789, %v798
        %802 = vrot.lane.b32.xlu0 %v483, 96
        %v803 = vpop.permute.xlu0 %802
        %804 = vrot.lane.b32.xlu0 %v488, 96
        %v805 = vpop.permute.xlu0 %804
        %v809 = vsel %vm581, %v797, 0
        %v812 = vsel %vm581, %v799, 0
        %814 = vmatprep.subr.mxu0 0.0
        %815 = vmatpush1.msra.mxu0 0.0
        %816 = vmatprep.subr.mxu0 0.0
        %817 = vmatpush1.msra.mxu0 0.0
        %818 = vmatprep.subr.mxu0 0.0
        %819 = vmatpush1.msra.mxu0 0.0
        %820 = vmatprep.subr.mxu0 0.0
        %821 = vmatpush1.msra.mxu0 0.0
        %822 = vmatprep.subr.mxu0 0.0
        %823 = vmatpush1.msra.mxu0 0.0
        %824 = vmatprep.subr.mxu0 0.0
        %825 = vmatpush1.msra.mxu0 0.0
        %826 = vmatprep.subr.mxu0 0.0
        %827 = vmatpush1.msra.mxu0 0.0
        %828 = vmatprep.subr.mxu0 0.0
        %829 = vmatpush1.msra.mxu0 0.0
        %830 = vmatprep.subr.mxu0 0.0
        %831 = vmatpush1.msra.mxu0 0.0
        %832 = vmatprep.subr.mxu0 0.0
        %833 = vmatpush1.msra.mxu0 0.0
        %834 = vmatprep.subr.mxu0 0.0
        %835 = vmatpush1.msra.mxu0 0.0
        %836 = vmatprep.subr.mxu0 0.0
        %837 = vmatpush1.msra.mxu0 0.0
        %838 = vmatprep.subr.mxu0 0.0
        %839 = vmatpush1.msra.mxu0 0.0
        %840 = vmatprep.subr.mxu0 0.0
        %841 = vmatpush1.msra.mxu0 0.0
        %842 = vmatprep.subr.mxu0 0.0
        %843 = vmatpush1.msra.mxu0 %v805
        %844 = vmatprep.subr.mxu0 0.0
        %845 = vmatpush1.msra.mxu0 %v803
        %846 = vmatprep.subr.mxu0 0.0
        %847 = vmatpush2.msra.mxu0 0.0
        %848 = vmatprep.subr.mxu0 0.0
        %849 = vmatpush2.msra.mxu0 0.0
        %850 = vmatprep.subr.mxu0 0.0
        %851 = vmatpush2.msra.mxu0 0.0
        %852 = vmatprep.subr.mxu0 0.0
        %853 = vmatpush2.msra.mxu0 0.0
        %854 = vmatprep.subr.mxu0 0.0
        %855 = vmatpush2.msra.mxu0 0.0
        %856 = vmatprep.subr.mxu0 0.0
        %857 = vmatpush2.msra.mxu0 0.0
        %858 = vmatprep.subr.mxu0 0.0
        %859 = vmatpush2.msra.mxu0 0.0
        %860 = vmatprep.subr.mxu0 0.0
        %861 = vmatpush2.msra.mxu0 0.0
        %862 = vmatprep.subr.mxu0 0.0
        %863 = vmatpush2.msra.mxu0 0.0
        %864 = vmatprep.subr.mxu0 0.0
        %865 = vmatpush2.msra.mxu0 0.0
        %866 = vmatprep.subr.mxu0 0.0
        %867 = vmatpush2.msra.mxu0 0.0
        %868 = vmatprep.subr.mxu0 0.0
        %869 = vmatpush2.msra.mxu0 0.0
        %870 = vmatprep.subr.mxu0 0.0
        %871 = vmatpush2.msra.mxu0 0.0
        %872 = vmatprep.subr.mxu0 0.0
        %873 = vmatpush2.msra.mxu0 0.0
        %874 = vmatprep.subr.mxu0 0.0
        %875 = vmatpush2.msra.mxu0 0.0
        %876 = vmatprep.subr.mxu0 0.0
        %877 = vmatpush2.msra.mxu0 0.0
        %878 = vmatprep.mubr.f32.mxu0 0.0
        %879 = vmatmul.mubr.f32.gmra.mxu0 %v809
        %v880 = vpop.f32.mrf.mxu0
        %v881 = vadd.f32 0.0, %v880
        %v882 = vpop.f32.mrf.mxu0
        %883 = vmatprep.mubr.f32.mxu0 0.0
        %884 = vmatmul.mubr.f32.gmra.mxu0 %v812
        %v885 = vpop.f32.mrf.mxu0
        %v886 = vadd.f32 0.0, %v885
        %v887 = vpop.f32.mrf.mxu0
        %888 = vdwg.mxu0
        %889 = vrot.lane.b32.xlu0 %v406, 64
        %v890 = vpop.permute.xlu0 %889
        %891 = vrot.lane.b32.xlu0 %v412, 64
        %v892 = vpop.permute.xlu0 %891
        %893 = vrot.lane.b32.xlu0 %v408, 64
        %v894 = vpop.permute.xlu0 %893
        %895 = vrot.lane.b32.xlu0 %v414, 64
        %v896 = vpop.permute.xlu0 %895
        %v897 = vsel %vm491, %v890, 0
        %v899 = vsel %vm491, %v892, 0
        %v901 = vsel %vm491, %v894, 0
        %v903 = vsel %vm491, %v896, 0
        %905 = vmatprep.subr.mxu0 0.0
        %906 = vmatpush1.xpose.msra.mxu0 0.0
        %907 = vmatprep.subr.mxu0 0.0
        %908 = vmatpush1.xpose.msra.mxu0 0.0
        %909 = vmatprep.subr.mxu0 0.0
        %910 = vmatpush1.xpose.msra.mxu0 0.0
        %911 = vmatprep.subr.mxu0 0.0
        %912 = vmatpush1.xpose.msra.mxu0 0.0
        %913 = vmatprep.subr.mxu0 0.0
        %914 = vmatpush1.xpose.msra.mxu0 0.0
        %915 = vmatprep.subr.mxu0 0.0
        %916 = vmatpush1.xpose.msra.mxu0 0.0
        %917 = vmatprep.subr.mxu0 0.0
        %918 = vmatpush1.xpose.msra.mxu0 0.0
        %919 = vmatprep.subr.mxu0 0.0
        %920 = vmatpush1.xpose.msra.mxu0 0.0
        %921 = vmatprep.subr.mxu0 0.0
        %922 = vmatpush1.xpose.msra.mxu0 0.0
        %923 = vmatprep.subr.mxu0 0.0
        %924 = vmatpush1.xpose.msra.mxu0 0.0
        %925 = vmatprep.subr.mxu0 0.0
        %926 = vmatpush1.xpose.msra.mxu0 0.0
        %927 = vmatprep.subr.mxu0 0.0
        %928 = vmatpush1.xpose.msra.mxu0 0.0
        %929 = vmatprep.subr.mxu0 0.0
        %930 = vmatpush1.xpose.msra.mxu0 0.0
        %931 = vmatprep.subr.mxu0 0.0
        %932 = vmatpush1.xpose.msra.mxu0 0.0
        %933 = vmatprep.subr.mxu0 0.0
        %934 = vmatpush1.xpose.msra.mxu0 %v903
        %935 = vmatprep.subr.mxu0 0.0
        %936 = vmatpush1.xpose.msra.mxu0 %v901
        %937 = vmatprep.subr.mxu0 0.0
        %938 = vmatpush2.xpose.msra.mxu0 0.0
        %939 = vmatprep.subr.mxu0 0.0
        %940 = vmatpush2.xpose.msra.mxu0 0.0
        %941 = vmatprep.subr.mxu0 0.0
        %942 = vmatpush2.xpose.msra.mxu0 0.0
        %943 = vmatprep.subr.mxu0 0.0
        %944 = vmatpush2.xpose.msra.mxu0 0.0
        %945 = vmatprep.subr.mxu0 0.0
        %946 = vmatpush2.xpose.msra.mxu0 0.0
        %947 = vmatprep.subr.mxu0 0.0
        %948 = vmatpush2.xpose.msra.mxu0 0.0
        %949 = vmatprep.subr.mxu0 0.0
        %950 = vmatpush2.xpose.msra.mxu0 0.0
        %951 = vmatprep.subr.mxu0 0.0
        %952 = vmatpush2.xpose.msra.mxu0 0.0
        %953 = vmatprep.subr.mxu0 0.0
        %954 = vmatpush2.xpose.msra.mxu0 0.0
        %955 = vmatprep.subr.mxu0 0.0
        %956 = vmatpush2.xpose.msra.mxu0 0.0
        %957 = vmatprep.subr.mxu0 0.0
        %958 = vmatpush2.xpose.msra.mxu0 0.0
        %959 = vmatprep.subr.mxu0 0.0
        %960 = vmatpush2.xpose.msra.mxu0 0.0
        %961 = vmatprep.subr.mxu0 0.0
        %962 = vmatpush2.xpose.msra.mxu0 0.0
        %963 = vmatprep.subr.mxu0 0.0
        %964 = vmatpush2.xpose.msra.mxu0 0.0
        %965 = vmatprep.subr.mxu0 0.0
        %966 = vmatpush2.xpose.msra.mxu0 0.0
        %967 = vmatprep.subr.mxu0 0.0
        %968 = vmatpush2.xpose.msra.mxu0 0.0
        %969 = vmatprep.mubr.f32.mxu0 0.0
        %970 = vmatmul.mubr.f32.gmra.mxu0 %v897
        %v971 = vpop.f32.mrf.mxu0
        %v972 = vadd.f32 0.0, %v971
        %v973 = vpop.f32.mrf.mxu0
        %974 = vmatprep.mubr.f32.mxu0 0.0
        %975 = vmatmul.mubr.f32.gmra.mxu0 %v899
        %v976 = vpop.f32.mrf.mxu0
        %v977 = vadd.f32 0.0, %v976
        %v978 = vpop.f32.mrf.mxu0
        %979 = vdwg.mxu0
        %v980 = vmul.f32 %v972, 0.17677669
        %v981 = vmul.f32 %v977, 0.17677669
        %v982 = vsel %vm581, %v980, -inf
        %983 = vmax.xlane.f32.xlu0 %v982
        %v984 = vpop.xlane.xlu0 %983
        %v985 = vsel %vm581, %v981, -inf
        %986 = vmax.xlane.f32.xlu0 %v985
        %v987 = vpop.xlane.xlu0 %986
        %v988 = vsub.f32 %v980, %v984
        %v989 = vsub.f32 %v981, %v987
        %v990 = vmul.f32 %v988, 1.442695
        %v991 = vpow.pop %v990
        %v992 = vmul.f32 %v989, 1.442695
        %v993 = vpow.pop %v992
        %v994 = vsel %vm581, %v991, 0.0
        %995 = vadd.xlane.f32.xlu0 %v994
        %v996 = vpop.xlane.xlu0 %995
        %v997 = vsel %vm581, %v993, 0.0
        %998 = vadd.xlane.f32.xlu0 %v997
        %v999 = vpop.xlane.xlu0 %998
        %v1000 = vrcp.pop %v996
        %v1001 = vmul.f32 %v991, %v1000
        %v1002 = vrcp.pop %v999
        %v1003 = vmul.f32 %v993, %v1002
        %1004 = vrot.lane.b32.xlu0 %v483, 64
        %v1005 = vpop.permute.xlu0 %1004
        %1006 = vrot.lane.b32.xlu0 %v488, 64
        %v1007 = vpop.permute.xlu0 %1006
        %v1011 = vsel %vm581, %v1001, 0
        %v1014 = vsel %vm581, %v1003, 0
        %1016 = vmatprep.subr.mxu0 0.0
        %1017 = vmatpush1.msra.mxu0 0.0
        %1018 = vmatprep.subr.mxu0 0.0
        %1019 = vmatpush1.msra.mxu0 0.0
        %1020 = vmatprep.subr.mxu0 0.0
        %1021 = vmatpush1.msra.mxu0 0.0
        %1022 = vmatprep.subr.mxu0 0.0
        %1023 = vmatpush1.msra.mxu0 0.0
        %1024 = vmatprep.subr.mxu0 0.0
        %1025 = vmatpush1.msra.mxu0 0.0
        %1026 = vmatprep.subr.mxu0 0.0
        %1027 = vmatpush1.msra.mxu0 0.0
        %1028 = vmatprep.subr.mxu0 0.0
        %1029 = vmatpush1.msra.mxu0 0.0
        %1030 = vmatprep.subr.mxu0 0.0
        %1031 = vmatpush1.msra.mxu0 0.0
        %1032 = vmatprep.subr.mxu0 0.0
        %1033 = vmatpush1.msra.mxu0 0.0
        %1034 = vmatprep.subr.mxu0 0.0
        %1035 = vmatpush1.msra.mxu0 0.0
        %1036 = vmatprep.subr.mxu0 0.0
        %1037 = vmatpush1.msra.mxu0 0.0
        %1038 = vmatprep.subr.mxu0 0.0
        %1039 = vmatpush1.msra.mxu0 0.0
        %1040 = vmatprep.subr.mxu0 0.0
        %1041 = vmatpush1.msra.mxu0 0.0
        %1042 = vmatprep.subr.mxu0 0.0
        %1043 = vmatpush1.msra.mxu0 0.0
        %1044 = vmatprep.subr.mxu0 0.0
        %1045 = vmatpush1.msra.mxu0 %v1007
        %1046 = vmatprep.subr.mxu0 0.0
        %1047 = vmatpush1.msra.mxu0 %v1005
        %1048 = vmatprep.subr.mxu0 0.0
        %1049 = vmatpush2.msra.mxu0 0.0
        %1050 = vmatprep.subr.mxu0 0.0
        %1051 = vmatpush2.msra.mxu0 0.0
        %1052 = vmatprep.subr.mxu0 0.0
        %1053 = vmatpush2.msra.mxu0 0.0
        %1054 = vmatprep.subr.mxu0 0.0
        %1055 = vmatpush2.msra.mxu0 0.0
        %1056 = vmatprep.subr.mxu0 0.0
        %1057 = vmatpush2.msra.mxu0 0.0
        %1058 = vmatprep.subr.mxu0 0.0
        %1059 = vmatpush2.msra.mxu0 0.0
        %1060 = vmatprep.subr.mxu0 0.0
        %1061 = vmatpush2.msra.mxu0 0.0
        %1062 = vmatprep.subr.mxu0 0.0
        %1063 = vmatpush2.msra.mxu0 0.0
        %1064 = vmatprep.subr.mxu0 0.0
        %1065 = vmatpush2.msra.mxu0 0.0
        %1066 = vmatprep.subr.mxu0 0.0
        %1067 = vmatpush2.msra.mxu0 0.0
        %1068 = vmatprep.subr.mxu0 0.0
        %1069 = vmatpush2.msra.mxu0 0.0
        %1070 = vmatprep.subr.mxu0 0.0
        %1071 = vmatpush2.msra.mxu0 0.0
        %1072 = vmatprep.subr.mxu0 0.0
        %1073 = vmatpush2.msra.mxu0 0.0
        %1074 = vmatprep.subr.mxu0 0.0
        %1075 = vmatpush2.msra.mxu0 0.0
        %1076 = vmatprep.subr.mxu0 0.0
        %1077 = vmatpush2.msra.mxu0 0.0
        %1078 = vmatprep.subr.mxu0 0.0
        %1079 = vmatpush2.msra.mxu0 0.0
        %1080 = vmatprep.mubr.f32.mxu0 0.0
        %1081 = vmatmul.mubr.f32.gmra.mxu0 %v1011
        %v1082 = vpop.f32.mrf.mxu0
        %v1083 = vadd.f32 0.0, %v1082
        %v1084 = vpop.f32.mrf.mxu0
        %1085 = vmatprep.mubr.f32.mxu0 0.0
        %1086 = vmatmul.mubr.f32.gmra.mxu0 %v1014
        %v1087 = vpop.f32.mrf.mxu0
        %v1088 = vadd.f32 0.0, %v1087
        %v1089 = vpop.f32.mrf.mxu0
        %1090 = vdwg.mxu0
        %1091 = vrot.lane.b32.xlu0 %v406, 32
        %v1092 = vpop.permute.xlu0 %1091
        %1093 = vrot.lane.b32.xlu0 %v412, 32
        %v1094 = vpop.permute.xlu0 %1093
        %1095 = vrot.lane.b32.xlu0 %v408, 32
        %v1096 = vpop.permute.xlu0 %1095
        %1097 = vrot.lane.b32.xlu0 %v414, 32
        %v1098 = vpop.permute.xlu0 %1097
        %v1099 = vsel %vm491, %v1092, 0
        %v1101 = vsel %vm491, %v1094, 0
        %v1103 = vsel %vm491, %v1096, 0
        %v1105 = vsel %vm491, %v1098, 0
        %1107 = vmatprep.subr.mxu0 0.0
        %1108 = vmatpush1.xpose.msra.mxu0 0.0
        %1109 = vmatprep.subr.mxu0 0.0
        %1110 = vmatpush1.xpose.msra.mxu0 0.0
        %1111 = vmatprep.subr.mxu0 0.0
        %1112 = vmatpush1.xpose.msra.mxu0 0.0
        %1113 = vmatprep.subr.mxu0 0.0
        %1114 = vmatpush1.xpose.msra.mxu0 0.0
        %1115 = vmatprep.subr.mxu0 0.0
        %1116 = vmatpush1.xpose.msra.mxu0 0.0
        %1117 = vmatprep.subr.mxu0 0.0
        %1118 = vmatpush1.xpose.msra.mxu0 0.0
        %1119 = vmatprep.subr.mxu0 0.0
        %1120 = vmatpush1.xpose.msra.mxu0 0.0
        %1121 = vmatprep.subr.mxu0 0.0
        %1122 = vmatpush1.xpose.msra.mxu0 0.0
        %1123 = vmatprep.subr.mxu0 0.0
        %1124 = vmatpush1.xpose.msra.mxu0 0.0
        %1125 = vmatprep.subr.mxu0 0.0
        %1126 = vmatpush1.xpose.msra.mxu0 0.0
        %1127 = vmatprep.subr.mxu0 0.0
        %1128 = vmatpush1.xpose.msra.mxu0 0.0
        %1129 = vmatprep.subr.mxu0 0.0
        %1130 = vmatpush1.xpose.msra.mxu0 0.0
        %1131 = vmatprep.subr.mxu0 0.0
        %1132 = vmatpush1.xpose.msra.mxu0 0.0
        %1133 = vmatprep.subr.mxu0 0.0
        %1134 = vmatpush1.xpose.msra.mxu0 0.0
        %1135 = vmatprep.subr.mxu0 0.0
        %1136 = vmatpush1.xpose.msra.mxu0 %v1105
        %1137 = vmatprep.subr.mxu0 0.0
        %1138 = vmatpush1.xpose.msra.mxu0 %v1103
        %1139 = vmatprep.subr.mxu0 0.0
        %1140 = vmatpush2.xpose.msra.mxu0 0.0
        %1141 = vmatprep.subr.mxu0 0.0
        %1142 = vmatpush2.xpose.msra.mxu0 0.0
        %1143 = vmatprep.subr.mxu0 0.0
        %1144 = vmatpush2.xpose.msra.mxu0 0.0
        %1145 = vmatprep.subr.mxu0 0.0
        %1146 = vmatpush2.xpose.msra.mxu0 0.0
        %1147 = vmatprep.subr.mxu0 0.0
        %1148 = vmatpush2.xpose.msra.mxu0 0.0
        %1149 = vmatprep.subr.mxu0 0.0
        %1150 = vmatpush2.xpose.msra.mxu0 0.0
        %1151 = vmatprep.subr.mxu0 0.0
        %1152 = vmatpush2.xpose.msra.mxu0 0.0
        %1153 = vmatprep.subr.mxu0 0.0
        %1154 = vmatpush2.xpose.msra.mxu0 0.0
        %1155 = vmatprep.subr.mxu0 0.0
        %1156 = vmatpush2.xpose.msra.mxu0 0.0
        %1157 = vmatprep.subr.mxu0 0.0
        %1158 = vmatpush2.xpose.msra.mxu0 0.0
        %1159 = vmatprep.subr.mxu0 0.0
        %1160 = vmatpush2.xpose.msra.mxu0 0.0
        %1161 = vmatprep.subr.mxu0 0.0
        %1162 = vmatpush2.xpose.msra.mxu0 0.0
        %1163 = vmatprep.subr.mxu0 0.0
        %1164 = vmatpush2.xpose.msra.mxu0 0.0
        %1165 = vmatprep.subr.mxu0 0.0
        %1166 = vmatpush2.xpose.msra.mxu0 0.0
        %1167 = vmatprep.subr.mxu0 0.0
        %1168 = vmatpush2.xpose.msra.mxu0 0.0
        %1169 = vmatprep.subr.mxu0 0.0
        %1170 = vmatpush2.xpose.msra.mxu0 0.0
        %1171 = vmatprep.mubr.f32.mxu0 0.0
        %1172 = vmatmul.mubr.f32.gmra.mxu0 %v1099
        %v1173 = vpop.f32.mrf.mxu0
        %v1174 = vadd.f32 0.0, %v1173
        %v1175 = vpop.f32.mrf.mxu0
        %1176 = vmatprep.mubr.f32.mxu0 0.0
        %1177 = vmatmul.mubr.f32.gmra.mxu0 %v1101
        %v1178 = vpop.f32.mrf.mxu0
        %v1179 = vadd.f32 0.0, %v1178
        %v1180 = vpop.f32.mrf.mxu0
        %1181 = vdwg.mxu0
        %v1182 = vmul.f32 %v1174, 0.17677669
        %v1183 = vmul.f32 %v1179, 0.17677669
        %v1184 = vsel %vm581, %v1182, -inf
        %1185 = vmax.xlane.f32.xlu0 %v1184
        %v1186 = vpop.xlane.xlu0 %1185
        %v1187 = vsel %vm581, %v1183, -inf
        %1188 = vmax.xlane.f32.xlu0 %v1187
        %v1189 = vpop.xlane.xlu0 %1188
        %v1190 = vsub.f32 %v1182, %v1186
        %v1191 = vsub.f32 %v1183, %v1189
        %v1192 = vmul.f32 %v1190, 1.442695
        %v1193 = vpow.pop %v1192
        %v1194 = vmul.f32 %v1191, 1.442695
        %v1195 = vpow.pop %v1194
        %v1196 = vsel %vm581, %v1193, 0.0
        %1197 = vadd.xlane.f32.xlu0 %v1196
        %v1198 = vpop.xlane.xlu0 %1197
        %v1199 = vsel %vm581, %v1195, 0.0
        %1200 = vadd.xlane.f32.xlu0 %v1199
        %v1201 = vpop.xlane.xlu0 %1200
        %v1202 = vrcp.pop %v1198
        %v1203 = vmul.f32 %v1193, %v1202
        %v1204 = vrcp.pop %v1201
        %v1205 = vmul.f32 %v1195, %v1204
        %1206 = vrot.lane.b32.xlu0 %v483, 32
        %v1207 = vpop.permute.xlu0 %1206
        %1208 = vrot.lane.b32.xlu0 %v488, 32
        %v1209 = vpop.permute.xlu0 %1208
        %v1213 = vsel %vm581, %v1203, 0
        %v1216 = vsel %vm581, %v1205, 0
        %1218 = vmatprep.subr.mxu0 0.0
        %1219 = vmatpush1.msra.mxu0 0.0
        %1220 = vmatprep.subr.mxu0 0.0
        %1221 = vmatpush1.msra.mxu0 0.0
        %1222 = vmatprep.subr.mxu0 0.0
        %1223 = vmatpush1.msra.mxu0 0.0
        %1224 = vmatprep.subr.mxu0 0.0
        %1225 = vmatpush1.msra.mxu0 0.0
        %1226 = vmatprep.subr.mxu0 0.0
        %1227 = vmatpush1.msra.mxu0 0.0
        %1228 = vmatprep.subr.mxu0 0.0
        %1229 = vmatpush1.msra.mxu0 0.0
        %1230 = vmatprep.subr.mxu0 0.0
        %1231 = vmatpush1.msra.mxu0 0.0
        %1232 = vmatprep.subr.mxu0 0.0
        %1233 = vmatpush1.msra.mxu0 0.0
        %1234 = vmatprep.subr.mxu0 0.0
        %1235 = vmatpush1.msra.mxu0 0.0
        %1236 = vmatprep.subr.mxu0 0.0
        %1237 = vmatpush1.msra.mxu0 0.0
        %1238 = vmatprep.subr.mxu0 0.0
        %1239 = vmatpush1.msra.mxu0 0.0
        %1240 = vmatprep.subr.mxu0 0.0
        %1241 = vmatpush1.msra.mxu0 0.0
        %1242 = vmatprep.subr.mxu0 0.0
        %1243 = vmatpush1.msra.mxu0 0.0
        %1244 = vmatprep.subr.mxu0 0.0
        %1245 = vmatpush1.msra.mxu0 0.0
        %1246 = vmatprep.subr.mxu0 0.0
        %1247 = vmatpush1.msra.mxu0 %v1209
        %1248 = vmatprep.subr.mxu0 0.0
        %1249 = vmatpush1.msra.mxu0 %v1207
        %1250 = vmatprep.subr.mxu0 0.0
        %1251 = vmatpush2.msra.mxu0 0.0
        %1252 = vmatprep.subr.mxu0 0.0
        %1253 = vmatpush2.msra.mxu0 0.0
        %1254 = vmatprep.subr.mxu0 0.0
        %1255 = vmatpush2.msra.mxu0 0.0
        %1256 = vmatprep.subr.mxu0 0.0
        %1257 = vmatpush2.msra.mxu0 0.0
        %1258 = vmatprep.subr.mxu0 0.0
        %1259 = vmatpush2.msra.mxu0 0.0
        %1260 = vmatprep.subr.mxu0 0.0
        %1261 = vmatpush2.msra.mxu0 0.0
        %1262 = vmatprep.subr.mxu0 0.0
        %1263 = vmatpush2.msra.mxu0 0.0
        %1264 = vmatprep.subr.mxu0 0.0
        %1265 = vmatpush2.msra.mxu0 0.0
        %1266 = vmatprep.subr.mxu0 0.0
        %1267 = vmatpush2.msra.mxu0 0.0
        %1268 = vmatprep.subr.mxu0 0.0
        %1269 = vmatpush2.msra.mxu0 0.0
        %1270 = vmatprep.subr.mxu0 0.0
        %1271 = vmatpush2.msra.mxu0 0.0
        %1272 = vmatprep.subr.mxu0 0.0
        %1273 = vmatpush2.msra.mxu0 0.0
        %1274 = vmatprep.subr.mxu0 0.0
        %1275 = vmatpush2.msra.mxu0 0.0
        %1276 = vmatprep.subr.mxu0 0.0
        %1277 = vmatpush2.msra.mxu0 0.0
        %1278 = vmatprep.subr.mxu0 0.0
        %1279 = vmatpush2.msra.mxu0 0.0
        %1280 = vmatprep.subr.mxu0 0.0
        %1281 = vmatpush2.msra.mxu0 0.0
        %1282 = vmatprep.mubr.f32.mxu0 0.0
        %1283 = vmatmul.mubr.f32.gmra.mxu0 %v1213
        %v1284 = vpop.f32.mrf.mxu0
        %v1285 = vadd.f32 0.0, %v1284
        %v1286 = vpop.f32.mrf.mxu0
        %1287 = vmatprep.mubr.f32.mxu0 0.0
        %1288 = vmatmul.mubr.f32.gmra.mxu0 %v1216
        %v1289 = vpop.f32.mrf.mxu0
        %v1290 = vadd.f32 0.0, %v1289
        %v1291 = vpop.f32.mrf.mxu0
        %1292 = vdwg.mxu0
        %1295 = vrot.lane.b32.xlu0 %v881, 32
        %v1296 = vpop.permute.xlu0 %1295
        %1297 = vrot.lane.b32.xlu0 %v886, 32
        %v1298 = vpop.permute.xlu0 %1297
        %1303 = vrot.lane.b32.xlu0 %v1083, 64
        %v1304 = vpop.permute.xlu0 %1303
        %1305 = vrot.lane.b32.xlu0 %v1088, 64
        %v1306 = vpop.permute.xlu0 %1305
        %1311 = vrot.lane.b32.xlu0 %v1285, 96
        %v1312 = vpop.permute.xlu0 %1311
        %1313 = vrot.lane.b32.xlu0 %v1290, 96
        %v1314 = vpop.permute.xlu0 %1313
        %v1317 = vsel %vm491, %v677, %v1296
        %v1318 = vsel %vm491, %v682, %v1298
        %vm1319 = vcmask 523264
        %v1320 = vsel %vm1319, %v1317, %v1304
        %v1321 = vsel %vm1319, %v1318, %v1306
        %vm1322 = vcmask 785408
        %v1323 = vsel %vm1322, %v1320, %v1312
        %v1324 = vsel %vm1322, %v1321, %v1314
        %v1325 = vld [vmem:[#allocation7] sm:$0xff]
        %v1326 = vld [vmem:[#allocation7 + $0x8] sm:$0xff]
        %v1327 = vld [vmem:[#allocation7 + $0x10] sm:$0xff]
        %v1328 = vld [vmem:[#allocation7 + $0x18] sm:$0xff]
        %v1329 = vld [vmem:[#allocation7 + $0x20] sm:$0xff]
        %v1330 = vld [vmem:[#allocation7 + $0x28] sm:$0xff]
        %v1331 = vld [vmem:[#allocation7 + $0x30] sm:$0xff]
        %v1332 = vld [vmem:[#allocation7 + $0x38] sm:$0xff]
        %v1333 = vld [vmem:[#allocation7 + $0x40] sm:$0xff]
        %v1334 = vld [vmem:[#allocation7 + $0x48] sm:$0xff]
        %v1335 = vld [vmem:[#allocation7 + $0x50] sm:$0xff]
        %v1336 = vld [vmem:[#allocation7 + $0x58] sm:$0xff]
        %v1337 = vld [vmem:[#allocation7 + $0x60] sm:$0xff]
        %v1338 = vld [vmem:[#allocation7 + $0x68] sm:$0xff]
        %v1339 = vld [vmem:[#allocation7 + $0x70] sm:$0xff]
        %v1340 = vld [vmem:[#allocation7 + $0x78] sm:$0xff]
        %v1341 = vld [vmem:[%s4] sm:$0x1]
        %v1343 = vlaneseq
        %v1344 = vshrl.u32 %v1343, 7
        %v1345 = vsub.s32 0, %v1344
        %v1346 = vrot.slane %v1341, %v1345
        %1348 = vmatprep.subr.mxu0 0.0
        %1349 = vmatpush1.xpose.msra.mxu0 %v1340
        %1350 = vmatprep.subr.mxu0 0.0
        %1351 = vmatpush1.xpose.msra.mxu0 %v1339
        %1352 = vmatprep.subr.mxu0 0.0
        %1353 = vmatpush1.xpose.msra.mxu0 %v1338
        %1354 = vmatprep.subr.mxu0 0.0
        %1355 = vmatpush1.xpose.msra.mxu0 %v1337
        %1356 = vmatprep.subr.mxu0 0.0
        %1357 = vmatpush1.xpose.msra.mxu0 %v1336
        %1358 = vmatprep.subr.mxu0 0.0
        %1359 = vmatpush1.xpose.msra.mxu0 %v1335
        %1360 = vmatprep.subr.mxu0 0.0
        %1361 = vmatpush1.xpose.msra.mxu0 %v1334
        %1362 = vmatprep.subr.mxu0 0.0
        %1363 = vmatpush1.xpose.msra.mxu0 %v1333
        %1364 = vmatprep.subr.mxu0 0.0
        %1365 = vmatpush1.xpose.msra.mxu0 %v1332
        %1366 = vmatprep.subr.mxu0 0.0
        %1367 = vmatpush1.xpose.msra.mxu0 %v1331
        %1368 = vmatprep.subr.mxu0 0.0
        %1369 = vmatpush1.xpose.msra.mxu0 %v1330
        %1370 = vmatprep.subr.mxu0 0.0
        %1371 = vmatpush1.xpose.msra.mxu0 %v1329
        %1372 = vmatprep.subr.mxu0 0.0
        %1373 = vmatpush1.xpose.msra.mxu0 %v1328
        %1374 = vmatprep.subr.mxu0 0.0
        %1375 = vmatpush1.xpose.msra.mxu0 %v1327
        %1376 = vmatprep.subr.mxu0 0.0
        %1377 = vmatpush1.xpose.msra.mxu0 %v1326
        %1378 = vmatprep.subr.mxu0 0.0
        %1379 = vmatpush1.xpose.msra.mxu0 %v1325
        %1380 = vmatprep.subr.mxu0 0.0
        %1381 = vmatpush2.xpose.msra.mxu0 0.0
        %1382 = vmatprep.subr.mxu0 0.0
        %1383 = vmatpush2.xpose.msra.mxu0 0.0
        %1384 = vmatprep.subr.mxu0 0.0
        %1385 = vmatpush2.xpose.msra.mxu0 0.0
        %1386 = vmatprep.subr.mxu0 0.0
        %1387 = vmatpush2.xpose.msra.mxu0 0.0
        %1388 = vmatprep.subr.mxu0 0.0
        %1389 = vmatpush2.xpose.msra.mxu0 0.0
        %1390 = vmatprep.subr.mxu0 0.0
        %1391 = vmatpush2.xpose.msra.mxu0 0.0
        %1392 = vmatprep.subr.mxu0 0.0
        %1393 = vmatpush2.xpose.msra.mxu0 0.0
        %1394 = vmatprep.subr.mxu0 0.0
        %1395 = vmatpush2.xpose.msra.mxu0 0.0
        %1396 = vmatprep.subr.mxu0 0.0
        %1397 = vmatpush2.xpose.msra.mxu0 0.0
        %1398 = vmatprep.subr.mxu0 0.0
        %1399 = vmatpush2.xpose.msra.mxu0 0.0
        %1400 = vmatprep.subr.mxu0 0.0
        %1401 = vmatpush2.xpose.msra.mxu0 0.0
        %1402 = vmatprep.subr.mxu0 0.0
        %1403 = vmatpush2.xpose.msra.mxu0 0.0
        %1404 = vmatprep.subr.mxu0 0.0
        %1405 = vmatpush2.xpose.msra.mxu0 0.0
        %1406 = vmatprep.subr.mxu0 0.0
        %1407 = vmatpush2.xpose.msra.mxu0 0.0
        %1408 = vmatprep.subr.mxu0 0.0
        %1409 = vmatpush2.xpose.msra.mxu0 0.0
        %1410 = vmatprep.subr.mxu0 0.0
        %1411 = vmatpush2.xpose.msra.mxu0 0.0
        %1412 = vmatprep.mubr.f32.mxu0 0.0
        %1413 = vmatmul.mubr.f32.gmra.mxu0 %v1323
        %v1414 = vpop.f32.mrf.mxu0
        %v1415 = vadd.f32 %v1346, %v1414
        %v1416 = vpop.f32.mrf.mxu0
        %1417 = vmatprep.mubr.f32.mxu0 0.0
        %1418 = vmatmul.mubr.f32.gmra.mxu0 %v1324
        %v1419 = vpop.f32.mrf.mxu0
        %v1420 = vadd.f32 %v1346, %v1419
        %v1421 = vpop.f32.mrf.mxu0
        %1422 = vdwg.mxu0
        %1423 = vst [vmem:[%s271] sm:$0xff] %v1415
        %1424 = vst [vmem:[%s271 + $0x8] sm:$0xff] %v1420
        %s1425 = sand.u32 %s141, 1
        %s1426 = scalar_lea.sflag [#allocation4], %s1425
        %s1427 = sand.u32 %s141, 1
        %s1428 = smul.addr %s1427, 16
        %s1429 = scalar_lea.vmem [#allocation8], %s1428
        // Predicated region
        $region53: #{tpu_custom_call.1} parent=39 // pred_check
          %p1430 = pneg %p151
        $region54: #{tpu_custom_call.1} parent=39 // pred_check_branch
          %1432 = sbr.rel (%p1430) target = $region56
        $region55: #{tpu_custom_call.1} parent=39 // pred_region
          %s1434 = ssub.s32 256, 256
          %1435 = vsyncadd %s1426, %s1434
          %s1436 = smul.addr %s23, 2
          %s1437 = smul.addr %s1436, 128
          %s1438 = scalar_lea.hbm %s5, %s1437
          %s1439 = sshll.u32 %s1429, 4
          %s1440 = int_to_ptr.vmem [resolvable:$true] %s1439
          %1445 = dma.vmem_to_hbm [thread:$0]  %s1440, 256, %s1438, %s1426, 128, 128, 8
        $region56: #{tpu_custom_call.1} parent=39 // pred_fallthru
          _
      $region40: #{tpu_custom_call.1} parent=5 // pred_fallthru
        _
      %p1446 = scmp.le.s32.totalorder 2, %s18
      // Predicated region
      $region57: #{tpu_custom_call.1} parent=5 // pred_check
        %p1447 = pneg %p1446
      $region58: #{tpu_custom_call.1} parent=5 // pred_check_branch
        %1449 = sbr.rel (%p1447) target = $region60
      $region59: #{tpu_custom_call.1} parent=5 // pred_region
        %s1450 = ssub.s32 %s18, 2
        // Predicated region
        $region61: #{tpu_custom_call.1} parent=59 // pred_check
          %p1451 = pneg %p157
        $region62: #{tpu_custom_call.1} parent=59 // pred_check_branch
          %1453 = sbr.rel (%p1451) target = $region64
        $region63: #{tpu_custom_call.1} parent=59 // pred_region
          %s1454 = sand.u32 %s142, 1
          %s1455 = scalar_lea.sflag [#allocation4], %s1454
          %s1456 = sand.u32 %s142, 1
          %s1457 = smul.addr %s1456, 16
          %s1458 = scalar_lea.vmem [#allocation8], %s1457
          %1459 = dma.done %s1455, 256
        $region64: #{tpu_custom_call.1} parent=59 // pred_fallthru
          _
      $region60: #{tpu_custom_call.1} parent=5 // pred_fallthru
        _
    $region6: #{tpu_custom_call.1} parent=1 // loop_footer
      %s22 = sadd.s32 1, %s18
    $region7: #{tpu_custom_call.1} parent=1 // loop_footer_branch
      %17 = sbr.rel target = $region3
    $region8: #{tpu_custom_call.1} parent=1 // loop_exit
      _
    %1460 = vsyncpa [#allocation3], 1
    %s1461 = scalar_lea.sflag [#allocation3], 1
    %1462 = vsyncpa %s1461, 1
    %1463 = vsyncpa [#allocation6], 1
    %1464 = vsyncpa [#allocation4], 1
    %s1465 = scalar_lea.sflag [#allocation4], 1
    %1466 = vsyncpa %s1465, 1

</llo_original>
